<compile_context>
chip_gen: v7x
topology: tpu7x:2x2x1
jax: 0.10.0
libtpu: 0.0.40
codegen_flags: <defaults>
</compile_context>

<pallas_src>
import functools

import jax
import jax.numpy as jnp
from jax import lax
from jax.experimental import pallas as pl
from jax.experimental.pallas import tpu as pltpu

# --- scaled-down config (original: hidden=768, filters=256, classes=3) ---
SEQ_LEN = 20                  # Config.build_dataset max_length
SEQ_PAD = 24                  # padded to a multiple of 8 sublanes (tail rows masked)
HIDDEN = 128                  # config.hidden_size (768 originally, scaled down)
K2 = 2 * HIDDEN               # fused-tap contraction depth = 256 (fills v6e/v7x MXU)
NUM_FILTERS = 128             # config.num_filters (256 originally, scaled down)
FILTER_SIZES = (2, 2, 2)
NUM_CONVS = len(FILTER_SIZES)
F3 = NUM_CONVS * NUM_FILTERS  # fused conv width (lane dim of the conv matmul) = 384
NUM_CLASSES = 3               # len(key)
OUT_PAD = 128                 # lane-dense output width; logits live in [:, :NUM_CLASSES]
VOCAB = 1024
B_BLK_MAX = 64                # cap on sequences per grid step (VMEM + megacore friendly)


def textcnn_kernel(x_ref, w_ref, cb_ref, fcw_ref, fcb_ref, o_ref, *, b_blk):
    """b_blk sequences per step: fused-tap conv matmul + ReLU + masked max-pool + FC."""
    x = x_ref[...]                                                        # (M, 256) bf16
    # Single K=256 matmul covers both conv taps and all 3 branches (filter axis fused).
    s = jnp.dot(x, w_ref[...], preferred_element_type=jnp.float32)       # (M, 384) f32
    s = jnp.maximum(s + cb_ref[...], 0.0)                                 # bias + ReLU
    # Zero conv windows that extend into the padded tail / next sequence, then
    # max-pool over time.  ReLU output >= 0, so 0 is neutral for the max.
    s3 = s.reshape(b_blk, SEQ_PAD, F3)
    t_idx = lax.broadcasted_iota(jnp.int32, (1, SEQ_PAD, 1), 1)
    s3 = jnp.where(t_idx < SEQ_LEN - 1, s3, 0.0)
    pooled = jnp.max(s3, axis=1)                                          # (b_blk, 384) f32
    # Final linear in bf16 (single-pass MXU), f32 accumulation, lane-dense 128-wide output.
    o_ref[...] = (jnp.dot(pooled.astype(jnp.bfloat16), fcw_ref[...],
                          preferred_element_type=jnp.float32)
                  + fcb_ref[...])


@jax.jit
def textcnn_head(enc, conv_w, conv_b, fc_w, fc_b):
    """enc: (B, SEQ_LEN, HIDDEN) f32 encoder output -> (B, NUM_CLASSES) f32 logits.

    conv_w: (NUM_CONVS, F, 2, H)  [nn.Conv2d(1, F, (2, H)).weight per branch]
    conv_b: (NUM_CONVS, F)        fc_w: (C, 3F)        fc_b: (C,)
    """
    B = enc.shape[0]
    assert enc.shape[1] == SEQ_LEN and enc.shape[2] == HIDDEN

    # Sequences per grid step: big enough to amortise the ~600-cycle step overhead,
    # small enough to keep >= 2 grid steps at modest batches (megacore on v7x).
    b_blk = max(8, min(B_BLK_MAX, pl.next_power_of_2(pl.cdiv(B, 2))))
    B_pad = pl.cdiv(B, b_blk) * b_blk

    # ---- repack params: fuse taps along K and the 3 conv branches along filters ----
    w0 = jnp.transpose(conv_w[:, :, 0, :], (2, 0, 1)).reshape(HIDDEN, F3)
    w1 = jnp.transpose(conv_w[:, :, 1, :], (2, 0, 1)).reshape(HIDDEN, F3)
    w = jnp.concatenate([w0, w1], axis=0).astype(jnp.bfloat16)            # (256, 384)
    cb = conv_b.reshape(1, F3).astype(jnp.float32)
    # FC: transpose + zero-pad the class axis to 128 lanes; bf16 weight, f32 bias.
    fcw = jnp.zeros((F3, OUT_PAD), jnp.bfloat16).at[:, :NUM_CLASSES].set(
        fc_w.T.astype(jnp.bfloat16))
    fcb = jnp.zeros((1, OUT_PAD), jnp.float32).at[:, :NUM_CLASSES].set(fc_b[None, :])

    # ---- build the fused-tap activation x2[t] = [enc[t], enc[t+1]] in bf16 ----
    # (pad seq 20->24 and batch to a b_blk multiple so every tile is (8,128)-aligned)
    enc_q = enc.astype(jnp.bfloat16)
    enc_next = jnp.concatenate([enc_q[:, 1:, :], jnp.zeros_like(enc_q[:, :1, :])], axis=1)
    x2 = jnp.concatenate([enc_q, enc_next], axis=-1)                      # (B, L, 256)
    x2 = jnp.pad(x2, ((0, B_pad - B), (0, SEQ_PAD - SEQ_LEN), (0, 0)))
    x2 = x2.reshape(B_pad * SEQ_PAD, K2)

    cost = pl.CostEstimate(
        flops=2 * B_pad * SEQ_PAD * K2 * F3 + 2 * B_pad * F3 * OUT_PAD,
        transcendentals=0,
        bytes_accessed=(B_pad * SEQ_PAD * K2 * 2 + K2 * F3 * 2 + F3 * 4
                        + F3 * OUT_PAD * 2 + OUT_PAD * 4 + B_pad * OUT_PAD * 4),
    )

    out = pl.pallas_call(
        functools.partial(textcnn_kernel, b_blk=b_blk),
        out_shape=jax.ShapeDtypeStruct((B_pad, OUT_PAD), jnp.float32),
        grid_spec=pltpu.PrefetchScalarGridSpec(
            num_scalar_prefetch=0,
            grid=(B_pad // b_blk,),
            in_specs=[
                pl.BlockSpec((b_blk * SEQ_PAD, K2), lambda i: (i, 0)),
                # Constant-index-map weights are fetched once; at the original
                # 768/256 config add pipeline_mode=pl.Buffered(1) here to drop the
                # redundant second buffer and keep VMEM headroom on v7x/v5e.
                pl.BlockSpec((K2, F3), lambda i: (0, 0)),
                pl.BlockSpec((1, F3), lambda i: (0, 0)),
                pl.BlockSpec((F3, OUT_PAD), lambda i: (0, 0)),
                pl.BlockSpec((1, OUT_PAD), lambda i: (0, 0)),
            ],
            out_specs=pl.BlockSpec((b_blk, OUT_PAD), lambda i: (i, 0)),
        ),
        compiler_params=pltpu.CompilerParams(
            dimension_semantics=("parallel",),
            vmem_limit_bytes=32 * 1024 * 1024,
        ),
        cost_estimate=cost,
    )(x2, w, cb, fcw, fcb)
    return out[:B, :NUM_CLASSES]


def reference_head(enc, conv_w, conv_b, fc_w, fc_b):
    """Plain-JAX reference (same bf16 quantisation of MXU operands as the kernel)."""
    enc_q = enc.astype(jnp.bfloat16).astype(jnp.float32)
    w_q = conv_w.astype(jnp.bfloat16).astype(jnp.float32)
    feats = []
    for c in range(NUM_CONVS):
        s = (jnp.einsum('bth,fh->btf', enc_q[:, :-1, :], w_q[c, :, 0, :])
             + jnp.einsum('bth,fh->btf', enc_q[:, 1:, :], w_q[c, :, 1, :])
             + conv_b[c][None, None, :])
        s = jax.nn.relu(s)
        feats.append(jnp.max(s, axis=1))
    feat = jnp.concatenate(feats, axis=1)
    feat_q = feat.astype(jnp.bfloat16).astype(jnp.float32)
    fcw_q = fc_w.astype(jnp.bfloat16).astype(jnp.float32)
    return feat_q @ fcw_q.T + fc_b


if __name__ == "__main__":
    key = jax.random.PRNGKey(0)
    k_emb, k_ids, k_len, k_cw, k_cb, k_fw, k_fb = jax.random.split(key, 7)

    B = 12   # not a multiple of b_blk: exercises batch padding; gives a 2-step grid
    # ---- "BERT" stub inputs: token ids + attention mask ----
    context = jax.random.randint(k_ids, (B, SEQ_LEN), 0, VOCAB, dtype=jnp.int32)
    lengths = jax.random.randint(k_len, (B,), 5, SEQ_LEN + 1, dtype=jnp.int32)
    mask = (jnp.arange(SEQ_LEN)[None, :] < lengths[:, None]).astype(jnp.float32)

    # deterministic embedding table standing in for the BERT encoder
    emb_table = jax.random.normal(k_emb, (VOCAB, HIDDEN), jnp.float32) * 0.1
    encoder_out = emb_table[context] * mask[..., None]        # (B, L, H)

    # ---- parameters (PyTorch shapes, deterministic init) ----
    conv_w = jax.random.normal(k_cw, (NUM_CONVS, NUM_FILTERS, 2, HIDDEN), jnp.float32) * 0.05
    conv_b = jax.random.normal(k_cb, (NUM_CONVS, NUM_FILTERS), jnp.float32) * 0.05
    fc_w = jax.random.normal(k_fw, (NUM_CLASSES, F3), jnp.float32) * 0.05
    fc_b = jax.random.normal(k_fb, (NUM_CLASSES,), jnp.float32) * 0.05

    out = jax.block_until_ready(textcnn_head(encoder_out, conv_w, conv_b, fc_w, fc_b))
    ref = reference_head(encoder_out, conv_w, conv_b, fc_w, fc_b)

    assert out.shape == (B, NUM_CLASSES), out.shape
    assert jnp.allclose(out, ref, atol=2e-3, rtol=2e-3), (out, ref)

    print("KERNEL_OK")
</pallas_src>

<mosaic_0001>
module attributes {stable_mosaic.version = 11 : i64} {
  func.func @textcnn_kernel(%arg0: i32, %arg1: memref<192x256xbf16, #tpu.memory_space<vmem>>, %arg2: memref<256x384xbf16, #tpu.memory_space<vmem>>, %arg3: memref<1x384xf32, #tpu.memory_space<vmem>>, %arg4: memref<384x128xbf16, #tpu.memory_space<vmem>>, %arg5: memref<1x128xf32, #tpu.memory_space<vmem>>, %arg6: memref<8x128xf32, #tpu.memory_space<vmem>>) attributes {dimension_semantics = [#tpu.dimension_semantics<parallel>], iteration_bounds = array<i64: 2>, scalar_prefetch = 0 : i64, scratch_operands = 0 : i64, tpu.core_type = #tpu.core_type<tc>, window_params = [{transform_indices = @transform_0, window_bounds = array<i64: 192, 256>}, {pipeline_mode = #tpu.pipeline_mode<synchronous>, transform_indices = @transform_1, window_bounds = array<i64: 256, 384>}, {pipeline_mode = #tpu.pipeline_mode<synchronous>, transform_indices = @transform_2, window_bounds = array<i64: 1, 384>}, {pipeline_mode = #tpu.pipeline_mode<synchronous>, transform_indices = @transform_3, window_bounds = array<i64: 384, 128>}, {pipeline_mode = #tpu.pipeline_mode<synchronous>, transform_indices = @transform_4, window_bounds = array<i64: 1, 128>}, {transform_indices = @transform_5, window_bounds = array<i64: 8, 128>}]} {
    %c0 = arith.constant 0 : index
    %c0_0 = arith.constant 0 : index
    %0 = vector.load %arg1[%c0, %c0_0] : memref<192x256xbf16, #tpu.memory_space<vmem>>, vector<192x256xbf16>
    %c0_1 = arith.constant 0 : index
    %c0_2 = arith.constant 0 : index
    %1 = vector.load %arg2[%c0_1, %c0_2] : memref<256x384xbf16, #tpu.memory_space<vmem>>, vector<256x384xbf16>
    %cst = arith.constant dense<0.000000e+00> : vector<192x384xf32>
    %2 = tpu.matmul %0, %1, %cst {dimension_numbers = #tpu.dot_dimension_numbers<[1], [0], [0], [1], [0, 0, 1, 1], [], []>} : vector<192x256xbf16>, vector<256x384xbf16>, vector<192x384xf32> -> vector<192x384xf32>
    %c0_3 = arith.constant 0 : index
    %c0_4 = arith.constant 0 : index
    %3 = vector.load %arg3[%c0_3, %c0_4] : memref<1x384xf32, #tpu.memory_space<vmem>>, vector<1x384xf32>
    %4 = vector.broadcast %3 : vector<1x384xf32> to vector<192x384xf32>
    %5 = arith.addf %2, %4 : vector<192x384xf32>
    %cst_5 = arith.constant 0.000000e+00 : f32
    %6 = vector.broadcast %cst_5 : f32 to vector<192x384xf32>
    %7 = arith.maximumf %5, %6 : vector<192x384xf32>
    %8 = vector.shape_cast %7 : vector<192x384xf32> to vector<8x24x384xf32>
    %9 = tpu.iota {dimensions = array<i32: 1>} : vector<1x24x1xi32>
    %c19_i32 = arith.constant 19 : i32
    %10 = vector.broadcast %c19_i32 : i32 to vector<1x24x1xi32>
    %11 = arith.cmpi slt, %9, %10 : vector<1x24x1xi32>
    %cst_6 = arith.constant 0.000000e+00 : f32
    %12 = vector.shape_cast %11 : vector<1x24x1xi1> to vector<1x24x1xi1>
    %13 = vector.broadcast %12 : vector<1x24x1xi1> to vector<8x24x384xi1>
    %14 = vector.broadcast %cst_6 : f32 to vector<8x24x384xf32>
    %15 = arith.select %13, %8, %14 : vector<8x24x384xi1>, vector<8x24x384xf32>
    %cst_7 = arith.constant dense<0xFF800000> : vector<8x384xf32>
    %16 = vector.multi_reduction <maximumf>, %15, %cst_7 [1] : vector<8x24x384xf32> to vector<8x384xf32>
    %17 = arith.truncf %16 : vector<8x384xf32> to vector<8x384xbf16>
    %c0_8 = arith.constant 0 : index
    %c0_9 = arith.constant 0 : index
    %18 = vector.load %arg4[%c0_8, %c0_9] : memref<384x128xbf16, #tpu.memory_space<vmem>>, vector<384x128xbf16>
    %cst_10 = arith.constant dense<0.000000e+00> : vector<8x128xf32>
    %19 = tpu.matmul %17, %18, %cst_10 {dimension_numbers = #tpu.dot_dimension_numbers<[1], [0], [0], [1], [0, 0, 1, 1], [], []>} : vector<8x384xbf16>, vector<384x128xbf16>, vector<8x128xf32> -> vector<8x128xf32>
    %c0_11 = arith.constant 0 : index
    %c0_12 = arith.constant 0 : index
    %20 = vector.load %arg5[%c0_11, %c0_12] : memref<1x128xf32, #tpu.memory_space<vmem>>, vector<1x128xf32>
    %21 = vector.broadcast %20 : vector<1x128xf32> to vector<8x128xf32>
    %22 = arith.addf %19, %21 : vector<8x128xf32>
    %c0_13 = arith.constant 0 : index
    %c0_14 = arith.constant 0 : index
    %23 = vector.load %arg6[%c0_13, %c0_14] : memref<8x128xf32, #tpu.memory_space<vmem>>, vector<8x128xf32>
    tpu.vector_store %arg6[%c0_13, %c0_14], %22 {strides = array<i32>} : memref<8x128xf32, #tpu.memory_space<vmem>>, vector<8x128xf32>,
    return
  }
  func.func @transform_0(%arg0: i32) -> (i32, i32) {
    %c0_i32 = arith.constant 0 : i32
    %c0_i32_0 = arith.constant 0 : i32
    return %arg0, %c0_i32 : i32, i32
  }
  func.func @transform_1(%arg0: i32) -> (i32, i32) {
    %c0_i32 = arith.constant 0 : i32
    %c0_i32_0 = arith.constant 0 : i32
    %c0_i32_1 = arith.constant 0 : i32
    return %c0_i32, %c0_i32_0 : i32, i32
  }
  func.func @transform_2(%arg0: i32) -> (i32, i32) {
    %c0_i32 = arith.constant 0 : i32
    %c0_i32_0 = arith.constant 0 : i32
    %c0_i32_1 = arith.constant 0 : i32
    return %c0_i32, %c0_i32_0 : i32, i32
  }
  func.func @transform_3(%arg0: i32) -> (i32, i32) {
    %c0_i32 = arith.constant 0 : i32
    %c0_i32_0 = arith.constant 0 : i32
    %c0_i32_1 = arith.constant 0 : i32
    return %c0_i32, %c0_i32_0 : i32, i32
  }
  func.func @transform_4(%arg0: i32) -> (i32, i32) {
    %c0_i32 = arith.constant 0 : i32
    %c0_i32_0 = arith.constant 0 : i32
    %c0_i32_1 = arith.constant 0 : i32
    return %c0_i32, %c0_i32_0 : i32, i32
  }
  func.func @transform_5(%arg0: i32) -> (i32, i32) {
    %c0_i32 = arith.constant 0 : i32
    %c0_i32_0 = arith.constant 0 : i32
    return %arg0, %c0_i32 : i32, i32
  }
}

</mosaic_0001>

<llo_original>
// kernel: textcnn_head.1
$region0: #{textcnn_head.1}
  #allocation0 [shape = 'u32[]', space=smem, size = 0x4, offset = 0x4, fixed_abs, tag = 'smem constant byte address 0x4 - core index']
  #allocation1 [shape = 'u32[144,128]{1,0:T(1,128)}', space=vmem, size = 0x12000, scoped, tag = 'internal scratch']
  %s0 = inlined_call_operand.vmem [shape: bf16[384,256], index: 0, kind: input, shape index: {}]
  %s1 = inlined_call_operand.vmem [shape: bf16[256,384], index: 1, kind: input, shape index: {}]
  %s2 = inlined_call_operand.vmem [shape: f32[1,384], index: 2, kind: input, shape index: {}]
  %s3 = inlined_call_operand.vmem [shape: bf16[384,128], index: 3, kind: input, shape index: {}]
  %s4 = inlined_call_operand.vmem [shape: f32[1,128], index: 4, kind: input, shape index: {}]
  %s5 = inlined_call_operand.vmem [shape: f32[16,128], index: 5, kind: output, shape index: {}]
  %s6 = sld [smem:[#allocation0]]
  $region53: #{textcnn_head.1} parent=0
    _
  %s8 = ssub.s32 1, %s6
  %s9 = scalar_select 0, %s8, %s6
  loop: start=0, step=1, limit=4
  $region2: #{textcnn_head.1} parent=0 // loop_pre_header
    _
  $region3: #{textcnn_head.1} parent=0 // loop_header
    %s11 = sphi 0, %s15
    %p12 = scmp.ge.s32.totalorder %s11, 4
    %s21 = sphi 0, %s23
    %s24 = sphi 0, %s21
    %s25 = sphi 0, %s24
    %s41 = sphi 0, %s25
    %s45 = sphi 0, %s45
    %s47 = sphi 0, %s45
    %s48 = sphi 0, %s47
    %s62 = sphi 0, %s48
    %s66 = sphi 0, %s66
    %s68 = sphi 0, %s66
    %s69 = sphi 0, %s68
    %s83 = sphi 0, %s69
    %s87 = sphi 0, %s87
    %s89 = sphi 0, %s87
    %s90 = sphi 0, %s89
    %s104 = sphi 0, %s90
    %s108 = sphi 0, %s108
    %s110 = sphi 0, %s108
    %s111 = sphi 0, %s110
    %s125 = sphi 0, %s111
    %s131 = sphi 0, %s133
    %s134 = sphi 0, %s131
    %s135 = sphi 0, %s134
    %s151 = sphi 0, %s135
  $region4: #{textcnn_head.1} parent=0 // loop_header_branch
    %14 = sbr.rel (%p12) target = $region8
  $region5: #{textcnn_head.1} parent=0 // loop_body
    %s16 = ssub.s32 %s11, 1
    %s17 = ssub.s32 %s11, 2
    %s18 = sadd.s32 %s11, 1
    %s19 = ssub.s32 %s11, %s18
    %p20 = scmp.eq.s32.totalorder %s19, 0
    %s22 = sadd.s32 %s21, 1
    %s23 = scalar_select %p20, %s21, %s22
    %p26 = pneg %p20
    %p27 = scmp.eq.s32.totalorder %s11, 1
    %p28 = por %p26, %p27
    %p29 = scmp.ne.s32.totalorder %s21, %s24
    %p30 = scmp.eq.s32.totalorder %s11, 0
    %p31 = por %p29, %p30
    %p32 = scmp.ne.s32.totalorder %s21, %s24
    %p33 = scmp.eq.s32.totalorder %s16, 1
    %p34 = por %p32, %p33
    %p35 = scmp.ne.s32.totalorder %s24, %s25
    %p36 = scmp.eq.s32.totalorder %s16, 0
    %p37 = por %p35, %p36
    %p38 = scmp.ne.s32.totalorder %s24, %s25
    %p39 = scmp.eq.s32.totalorder %s17, 1
    %p40 = por %p38, %p39
    %p42 = scmp.ne.s32.totalorder %s25, %s41
    %p43 = scmp.eq.s32.totalorder %s17, 0
    %p44 = por %p42, %p43
    %s46 = sadd.s32 %s45, 1
    %p49 = scmp.eq.s32.totalorder %s11, 1
    %p50 = scmp.ne.s32.totalorder %s45, %s47
    %p51 = scmp.eq.s32.totalorder %s11, 0
    %p52 = por %p50, %p51
    %p53 = scmp.ne.s32.totalorder %s45, %s47
    %p54 = scmp.eq.s32.totalorder %s16, 1
    %p55 = por %p53, %p54
    %p56 = scmp.ne.s32.totalorder %s47, %s48
    %p57 = scmp.eq.s32.totalorder %s16, 0
    %p58 = por %p56, %p57
    %p59 = scmp.ne.s32.totalorder %s47, %s48
    %p60 = scmp.eq.s32.totalorder %s17, 1
    %p61 = por %p59, %p60
    %p63 = scmp.ne.s32.totalorder %s48, %s62
    %p64 = scmp.eq.s32.totalorder %s17, 0
    %p65 = por %p63, %p64
    %s67 = sadd.s32 %s66, 1
    %p70 = scmp.eq.s32.totalorder %s11, 1
    %p71 = scmp.ne.s32.totalorder %s66, %s68
    %p72 = scmp.eq.s32.totalorder %s11, 0
    %p73 = por %p71, %p72
    %p74 = scmp.ne.s32.totalorder %s66, %s68
    %p75 = scmp.eq.s32.totalorder %s16, 1
    %p76 = por %p74, %p75
    %p77 = scmp.ne.s32.totalorder %s68, %s69
    %p78 = scmp.eq.s32.totalorder %s16, 0
    %p79 = por %p77, %p78
    %p80 = scmp.ne.s32.totalorder %s68, %s69
    %p81 = scmp.eq.s32.totalorder %s17, 1
    %p82 = por %p80, %p81
    %p84 = scmp.ne.s32.totalorder %s69, %s83
    %p85 = scmp.eq.s32.totalorder %s17, 0
    %p86 = por %p84, %p85
    %s88 = sadd.s32 %s87, 1
    %p91 = scmp.eq.s32.totalorder %s11, 1
    %p92 = scmp.ne.s32.totalorder %s87, %s89
    %p93 = scmp.eq.s32.totalorder %s11, 0
    %p94 = por %p92, %p93
    %p95 = scmp.ne.s32.totalorder %s87, %s89
    %p96 = scmp.eq.s32.totalorder %s16, 1
    %p97 = por %p95, %p96
    %p98 = scmp.ne.s32.totalorder %s89, %s90
    %p99 = scmp.eq.s32.totalorder %s16, 0
    %p100 = por %p98, %p99
    %p101 = scmp.ne.s32.totalorder %s89, %s90
    %p102 = scmp.eq.s32.totalorder %s17, 1
    %p103 = por %p101, %p102
    %p105 = scmp.ne.s32.totalorder %s90, %s104
    %p106 = scmp.eq.s32.totalorder %s17, 0
    %p107 = por %p105, %p106
    %s109 = sadd.s32 %s108, 1
    %p112 = scmp.eq.s32.totalorder %s11, 1
    %p113 = scmp.ne.s32.totalorder %s108, %s110
    %p114 = scmp.eq.s32.totalorder %s11, 0
    %p115 = por %p113, %p114
    %p116 = scmp.ne.s32.totalorder %s108, %s110
    %p117 = scmp.eq.s32.totalorder %s16, 1
    %p118 = por %p116, %p117
    %p119 = scmp.ne.s32.totalorder %s110, %s111
    %p120 = scmp.eq.s32.totalorder %s16, 0
    %p121 = por %p119, %p120
    %p122 = scmp.ne.s32.totalorder %s110, %s111
    %p123 = scmp.eq.s32.totalorder %s17, 1
    %p124 = por %p122, %p123
    %p126 = scmp.ne.s32.totalorder %s111, %s125
    %p127 = scmp.eq.s32.totalorder %s17, 0
    %p128 = por %p126, %p127
    %s129 = ssub.s32 %s11, %s18
    %p130 = scmp.eq.s32.totalorder %s129, 0
    %s132 = sadd.s32 %s131, 1
    %s133 = scalar_select %p130, %s131, %s132
    %p136 = pneg %p130
    %p137 = scmp.eq.s32.totalorder %s11, 1
    %p138 = por %p136, %p137
    %p139 = scmp.ne.s32.totalorder %s131, %s134
    %p140 = scmp.eq.s32.totalorder %s11, 0
    %p141 = por %p139, %p140
    %p142 = scmp.ne.s32.totalorder %s131, %s134
    %p143 = scmp.eq.s32.totalorder %s16, 1
    %p144 = por %p142, %p143
    %p145 = scmp.ne.s32.totalorder %s134, %s135
    %p146 = scmp.eq.s32.totalorder %s16, 0
    %p147 = por %p145, %p146
    %p148 = scmp.ne.s32.totalorder %s134, %s135
    %p149 = scmp.eq.s32.totalorder %s17, 1
    %p150 = por %p148, %p149
    %p152 = scmp.ne.s32.totalorder %s135, %s151
    %p153 = scmp.eq.s32.totalorder %s17, 0
    %p154 = por %p152, %p153
    %p155 = scmp.le.s32.totalorder 1, %s11
    %p156 = scmp.lt.s32.totalorder %s11, 3
    %p157 = pnand %p155, %p156
    %p158 = pneg %p157
    // Predicated region
    $region9: #{textcnn_head.1} parent=5 // pred_check
      _
    $region10: #{textcnn_head.1} parent=5 // pred_check_branch
      %160 = sbr.rel (%p157) target = $region12
    $region11: #{textcnn_head.1} parent=5 // pred_region
      %s161 = ssub.s32 %s11, 1
      // Predicated region
      $region13: #{textcnn_head.1} parent=11 // pred_check
        %p162 = pneg %p58
      $region14: #{textcnn_head.1} parent=11 // pred_check_branch
        %164 = sbr.rel (%p162) target = $region16
      $region15: #{textcnn_head.1} parent=11 // pred_region
        _
      $region16: #{textcnn_head.1} parent=11 // pred_fallthru
        _
      // Predicated region
      $region17: #{textcnn_head.1} parent=11 // pred_check
        %p165 = pneg %p79
      $region18: #{textcnn_head.1} parent=11 // pred_check_branch
        %167 = sbr.rel (%p165) target = $region20
      $region19: #{textcnn_head.1} parent=11 // pred_region
        _
      $region20: #{textcnn_head.1} parent=11 // pred_fallthru
        _
      // Predicated region
      $region21: #{textcnn_head.1} parent=11 // pred_check
        %p168 = pneg %p100
      $region22: #{textcnn_head.1} parent=11 // pred_check_branch
        %170 = sbr.rel (%p168) target = $region24
      $region23: #{textcnn_head.1} parent=11 // pred_region
        _
      $region24: #{textcnn_head.1} parent=11 // pred_fallthru
        _
      // Predicated region
      $region25: #{textcnn_head.1} parent=11 // pred_check
        %p171 = pneg %p121
      $region26: #{textcnn_head.1} parent=11 // pred_check_branch
        %173 = sbr.rel (%p171) target = $region28
      $region27: #{textcnn_head.1} parent=11 // pred_region
        _
      $region28: #{textcnn_head.1} parent=11 // pred_fallthru
        _
    $region12: #{textcnn_head.1} parent=5 // pred_fallthru
      _
    %p174 = scmp.lt.s32.totalorder %s11, 2
    // Predicated region
    $region29: #{textcnn_head.1} parent=5 // pred_check
      %p175 = pneg %p174
    $region30: #{textcnn_head.1} parent=5 // pred_check_branch
      %177 = sbr.rel (%p175) target = $region32
    $region31: #{textcnn_head.1} parent=5 // pred_region
      // Predicated region
      $region33: #{textcnn_head.1} parent=31 // pred_check
        %p178 = pneg %p31
      $region34: #{textcnn_head.1} parent=31 // pred_check_branch
        %180 = sbr.rel (%p178) target = $region36
      $region35: #{textcnn_head.1} parent=31 // pred_region
        %s181 = smul.u32 24, %s11
        %p182 = scmp.lt.s32.totalorder %s181, 47
        %s183 = scalar_select %p182, %s181, 47
        %s184 = smul.addr %s183, 2
        %s185 = smul.addr %s184, 4
        %s186 = scalar_lea.vmem %s0, %s185
        %s187 = smul.u32 24, %s11
      $region36: #{textcnn_head.1} parent=31 // pred_fallthru
        _
    $region32: #{textcnn_head.1} parent=5 // pred_fallthru
      _
    %p188 = scmp.le.s32.totalorder 1, %s11
    %p189 = scmp.lt.s32.totalorder %s11, 3
    %p190 = pnand %p188, %p189
    %p191 = pneg %p190
    // Predicated region
    $region37: #{textcnn_head.1} parent=5 // pred_check
      _
    $region38: #{textcnn_head.1} parent=5 // pred_check_branch
      %193 = sbr.rel (%p190) target = $region40
    $region39: #{textcnn_head.1} parent=5 // pred_region
      %s194 = ssub.s32 %s11, 1
      %s195 = smul.u32 24, %s16
      %p196 = scmp.lt.s32.totalorder %s195, 47
      %s197 = scalar_select %p196, %s195, 47
      %s198 = smul.addr %s197, 2
      %s199 = smul.addr %s198, 4
      %s200 = scalar_lea.vmem %s0, %s199
      %p201 = pneg %p37
      %p202 = pneg %p34
      %p203 = pneg %p58
      %p204 = pneg %p55
      %p205 = pneg %p79
      %p206 = pneg %p76
      %p207 = pneg %p100
      %p208 = pneg %p97
      %p209 = pneg %p121
      %p210 = pneg %p118
      %p211 = pneg %p147
      %p212 = pneg %p144
      %p213 = scmp.lt.s32.totalorder %s16, 1
      %s214 = scalar_select %p213, %s16, 1
      %s215 = smul.addr %s214, 8
      %s216 = scalar_lea.vmem %s5, %s215
      %s217 = smul.u32 24, %s16
      %p218 = scmp.lt.s32.totalorder %s217, 47
      %s219 = scalar_select %p218, %s217, 47
      %s220 = smul.addr %s219, 2
      %s221 = smul.addr %s220, 4
      %s222 = scalar_lea.vmem %s0, %s221
      %s223 = smul.u32 24, %s16
      %p224 = scmp.lt.s32.totalorder %s16, 1
      %s225 = scalar_select %p224, %s16, 1
      %s226 = smul.addr %s225, 8
      %s227 = scalar_lea.vmem %s5, %s226
      %v229 = vld [vmem:[%s222] sm:$0xff]
      %v230 = vld [vmem:[%s222 + $0x8] sm:$0xff]
      %v231 = vld [vmem:[%s222 + $0x10] sm:$0xff]
      %v232 = vld [vmem:[%s222 + $0x18] sm:$0xff]
      %v233 = vld [vmem:[%s222 + $0x20] sm:$0xff]
      %v234 = vld [vmem:[%s222 + $0x28] sm:$0xff]
      %v235 = vld [vmem:[%s222 + $0x30] sm:$0xff]
      %v236 = vld [vmem:[%s222 + $0x38] sm:$0xff]
      %v237 = vld [vmem:[%s222 + $0x40] sm:$0xff]
      %v238 = vld [vmem:[%s222 + $0x48] sm:$0xff]
      %v239 = vld [vmem:[%s222 + $0x50] sm:$0xff]
      %v240 = vld [vmem:[%s222 + $0x58] sm:$0xff]
      %v241 = vld [vmem:[%s222 + $0x60] sm:$0xff]
      %v242 = vld [vmem:[%s222 + $0x68] sm:$0xff]
      %v243 = vld [vmem:[%s222 + $0x70] sm:$0xff]
      %v244 = vld [vmem:[%s222 + $0x78] sm:$0xff]
      %v245 = vld [vmem:[%s222 + $0x80] sm:$0xff]
      %v246 = vld [vmem:[%s222 + $0x88] sm:$0xff]
      %v247 = vld [vmem:[%s222 + $0x90] sm:$0xff]
      %v248 = vld [vmem:[%s222 + $0x98] sm:$0xff]
      %v249 = vld [vmem:[%s222 + $0xa0] sm:$0xff]
      %v250 = vld [vmem:[%s222 + $0xa8] sm:$0xff]
      %v251 = vld [vmem:[%s222 + $0xb0] sm:$0xff]
      %v252 = vld [vmem:[%s222 + $0xb8] sm:$0xff]
      %v253 = vld [vmem:[%s1] sm:$0xff]
      %v254 = vld [vmem:[%s1 + $0x8] sm:$0xf]
      %v255 = vld [vmem:[%s1 + $0xc] sm:$0xff]
      %v256 = vld [vmem:[%s1 + $0x14] sm:$0xf]
      %v257 = vld [vmem:[%s1 + $0x18] sm:$0xff]
      %v258 = vld [vmem:[%s1 + $0x20] sm:$0xf]
      %v259 = vld [vmem:[%s1 + $0x24] sm:$0xff]
      %v260 = vld [vmem:[%s1 + $0x2c] sm:$0xf]
      %v261 = vld [vmem:[%s1 + $0x30] sm:$0xff]
      %v262 = vld [vmem:[%s1 + $0x38] sm:$0xf]
      %v263 = vld [vmem:[%s1 + $0x3c] sm:$0xff]
      %v264 = vld [vmem:[%s1 + $0x44] sm:$0xf]
      %v265 = vld [vmem:[%s1 + $0x48] sm:$0xff]
      %v266 = vld [vmem:[%s1 + $0x50] sm:$0xf]
      %v267 = vld [vmem:[%s1 + $0x54] sm:$0xff]
      %v268 = vld [vmem:[%s1 + $0x5c] sm:$0xf]
      %v269 = vld [vmem:[%s1 + $0x60] sm:$0xff]
      %v270 = vld [vmem:[%s1 + $0x68] sm:$0xf]
      %v271 = vld [vmem:[%s1 + $0x6c] sm:$0xff]
      %v272 = vld [vmem:[%s1 + $0x74] sm:$0xf]
      %v273 = vld [vmem:[%s1 + $0x78] sm:$0xff]
      %v274 = vld [vmem:[%s1 + $0x80] sm:$0xf]
      %v275 = vld [vmem:[%s1 + $0x84] sm:$0xff]
      %v276 = vld [vmem:[%s1 + $0x8c] sm:$0xf]
      %v277 = vld [vmem:[%s1 + $0x90] sm:$0xff]
      %v278 = vld [vmem:[%s1 + $0x98] sm:$0xf]
      %v279 = vld [vmem:[%s1 + $0x9c] sm:$0xff]
      %v280 = vld [vmem:[%s1 + $0xa4] sm:$0xf]
      %v281 = vld [vmem:[%s1 + $0xa8] sm:$0xff]
      %v282 = vld [vmem:[%s1 + $0xb0] sm:$0xf]
      %v283 = vld [vmem:[%s1 + $0xb4] sm:$0xff]
      %v284 = vld [vmem:[%s1 + $0xbc] sm:$0xf]
      %v285 = vld [vmem:[%s1 + $0xc0] sm:$0xff]
      %v286 = vld [vmem:[%s1 + $0xc8] sm:$0xf]
      %v287 = vld [vmem:[%s1 + $0xcc] sm:$0xff]
      %v288 = vld [vmem:[%s1 + $0xd4] sm:$0xf]
      %v289 = vld [vmem:[%s1 + $0xd8] sm:$0xff]
      %v290 = vld [vmem:[%s1 + $0xe0] sm:$0xf]
      %v291 = vld [vmem:[%s1 + $0xe4] sm:$0xff]
      %v292 = vld [vmem:[%s1 + $0xec] sm:$0xf]
      %v293 = vld [vmem:[%s1 + $0xf0] sm:$0xff]
      %v294 = vld [vmem:[%s1 + $0xf8] sm:$0xf]
      %v295 = vld [vmem:[%s1 + $0xfc] sm:$0xff]
      %v296 = vld [vmem:[%s1 + $0x104] sm:$0xf]
      %v297 = vld [vmem:[%s1 + $0x108] sm:$0xff]
      %v298 = vld [vmem:[%s1 + $0x110] sm:$0xf]
      %v299 = vld [vmem:[%s1 + $0x114] sm:$0xff]
      %v300 = vld [vmem:[%s1 + $0x11c] sm:$0xf]
      %v301 = vld [vmem:[%s1 + $0x120] sm:$0xff]
      %v302 = vld [vmem:[%s1 + $0x128] sm:$0xf]
      %v303 = vld [vmem:[%s1 + $0x12c] sm:$0xff]
      %v304 = vld [vmem:[%s1 + $0x134] sm:$0xf]
      %v305 = vld [vmem:[%s1 + $0x138] sm:$0xff]
      %v306 = vld [vmem:[%s1 + $0x140] sm:$0xf]
      %v307 = vld [vmem:[%s1 + $0x144] sm:$0xff]
      %v308 = vld [vmem:[%s1 + $0x14c] sm:$0xf]
      %v309 = vld [vmem:[%s1 + $0x150] sm:$0xff]
      %v310 = vld [vmem:[%s1 + $0x158] sm:$0xf]
      %v311 = vld [vmem:[%s1 + $0x15c] sm:$0xff]
      %v312 = vld [vmem:[%s1 + $0x164] sm:$0xf]
      %v313 = vld [vmem:[%s1 + $0x168] sm:$0xff]
      %v314 = vld [vmem:[%s1 + $0x170] sm:$0xf]
      %v315 = vld [vmem:[%s1 + $0x174] sm:$0xff]
      %v316 = vld [vmem:[%s1 + $0x17c] sm:$0xf]
      %v317 = vld [vmem:[%s2] sm:$0x7]
      %v319 = vlaneseq
      %v320 = vshrl.u32 %v319, 7
      %v321 = vsub.s32 0, %v320
      %v322 = vrot.slane %v317, %v321
      %v323 = vlaneseq
      %v324 = vshrl.u32 %v323, 7
      %v325 = vsub.s32 1, %v324
      %v326 = vrot.slane %v317, %v325
      %v327 = vlaneseq
      %v328 = vshrl.u32 %v327, 7
      %v329 = vsub.s32 2, %v328
      %v330 = vrot.slane %v317, %v329
      %v358 = vunpack.c.l.b16 %v229
      %v359 = vunpack.c.h.b16 %v229
      %v360 = vunpack.c.l.b16 %v230
      %v361 = vunpack.c.h.b16 %v230
      %v362 = vunpack.c.l.b16 %v231
      %v363 = vunpack.c.h.b16 %v231
      %v364 = vunpack.c.l.b16 %v232
      %v365 = vunpack.c.h.b16 %v232
      %v366 = vunpack.c.l.b16 %v233
      %v367 = vunpack.c.h.b16 %v233
      %v368 = vunpack.c.l.b16 %v234
      %v369 = vunpack.c.h.b16 %v234
      %v370 = vunpack.c.l.b16 %v235
      %v371 = vunpack.c.h.b16 %v235
      %v372 = vunpack.c.l.b16 %v236
      %v373 = vunpack.c.h.b16 %v236
      %v374 = vunpack.c.l.b16 %v237
      %v375 = vunpack.c.h.b16 %v237
      %v376 = vunpack.c.l.b16 %v238
      %v377 = vunpack.c.h.b16 %v238
      %v378 = vunpack.c.l.b16 %v239
      %v379 = vunpack.c.h.b16 %v239
      %v380 = vunpack.c.l.b16 %v240
      %v381 = vunpack.c.h.b16 %v240
      %v382 = vunpack.c.l.b16 %v241
      %v383 = vunpack.c.h.b16 %v241
      %v384 = vunpack.c.l.b16 %v242
      %v385 = vunpack.c.h.b16 %v242
      %v386 = vunpack.c.l.b16 %v243
      %v387 = vunpack.c.h.b16 %v243
      %v388 = vunpack.c.l.b16 %v244
      %v389 = vunpack.c.h.b16 %v244
      %v390 = vunpack.c.l.b16 %v245
      %v391 = vunpack.c.h.b16 %v245
      %v392 = vunpack.c.l.b16 %v246
      %v393 = vunpack.c.h.b16 %v246
      %v394 = vunpack.c.l.b16 %v247
      %v395 = vunpack.c.h.b16 %v247
      %v396 = vunpack.c.l.b16 %v248
      %v397 = vunpack.c.h.b16 %v248
      %v398 = vunpack.c.l.b16 %v249
      %v399 = vunpack.c.h.b16 %v249
      %v400 = vunpack.c.l.b16 %v250
      %v401 = vunpack.c.h.b16 %v250
      %v402 = vunpack.c.l.b16 %v251
      %v403 = vunpack.c.h.b16 %v251
      %v404 = vunpack.c.l.b16 %v252
      %v405 = vunpack.c.h.b16 %v252
      %v406 = vpack.c.b16 %v360, %v358
      %v407 = vpack.c.b16 %v361, %v359
      %v408 = vpack.c.b16 %v364, %v362
      %v409 = vpack.c.b16 %v365, %v363
      %v410 = vpack.c.b16 %v368, %v366
      %v411 = vpack.c.b16 %v369, %v367
      %v412 = vpack.c.b16 %v372, %v370
      %v413 = vpack.c.b16 %v373, %v371
      %v414 = vpack.c.b16 %v376, %v374
      %v415 = vpack.c.b16 %v377, %v375
      %v416 = vpack.c.b16 %v380, %v378
      %v417 = vpack.c.b16 %v381, %v379
      %v418 = vpack.c.b16 %v384, %v382
      %v419 = vpack.c.b16 %v385, %v383
      %v420 = vpack.c.b16 %v388, %v386
      %v421 = vpack.c.b16 %v389, %v387
      %v422 = vpack.c.b16 %v392, %v390
      %v423 = vpack.c.b16 %v393, %v391
      %v424 = vpack.c.b16 %v396, %v394
      %v425 = vpack.c.b16 %v397, %v395
      %v426 = vpack.c.b16 %v400, %v398
      %v427 = vpack.c.b16 %v401, %v399
      %v428 = vpack.c.b16 %v404, %v402
      %v429 = vpack.c.b16 %v405, %v403
      %v518 = vunpack.c.l.b16 %v253
      %v519 = vunpack.c.h.b16 %v253
      %v520 = vunpack.c.l.b16 %v254
      %v521 = vunpack.c.l.b16 %v255
      %v522 = vunpack.c.h.b16 %v255
      %v523 = vunpack.c.l.b16 %v256
      %v524 = vunpack.c.l.b16 %v257
      %v525 = vunpack.c.h.b16 %v257
      %v526 = vunpack.c.l.b16 %v258
      %v527 = vunpack.c.l.b16 %v259
      %v528 = vunpack.c.h.b16 %v259
      %v529 = vunpack.c.l.b16 %v260
      %v530 = vunpack.c.l.b16 %v261
      %v531 = vunpack.c.h.b16 %v261
      %v532 = vunpack.c.l.b16 %v262
      %v533 = vunpack.c.l.b16 %v263
      %v534 = vunpack.c.h.b16 %v263
      %v535 = vunpack.c.l.b16 %v264
      %v536 = vunpack.c.l.b16 %v265
      %v537 = vunpack.c.h.b16 %v265
      %v538 = vunpack.c.l.b16 %v266
      %v539 = vunpack.c.l.b16 %v267
      %v540 = vunpack.c.h.b16 %v267
      %v541 = vunpack.c.l.b16 %v268
      %v542 = vunpack.c.l.b16 %v269
      %v543 = vunpack.c.h.b16 %v269
      %v544 = vunpack.c.l.b16 %v270
      %v545 = vunpack.c.l.b16 %v271
      %v546 = vunpack.c.h.b16 %v271
      %v547 = vunpack.c.l.b16 %v272
      %v548 = vunpack.c.l.b16 %v273
      %v549 = vunpack.c.h.b16 %v273
      %v550 = vunpack.c.l.b16 %v274
      %v551 = vunpack.c.l.b16 %v275
      %v552 = vunpack.c.h.b16 %v275
      %v553 = vunpack.c.l.b16 %v276
      %v554 = vunpack.c.l.b16 %v277
      %v555 = vunpack.c.h.b16 %v277
      %v556 = vunpack.c.l.b16 %v278
      %v557 = vunpack.c.l.b16 %v279
      %v558 = vunpack.c.h.b16 %v279
      %v559 = vunpack.c.l.b16 %v280
      %v560 = vunpack.c.l.b16 %v281
      %v561 = vunpack.c.h.b16 %v281
      %v562 = vunpack.c.l.b16 %v282
      %v563 = vunpack.c.l.b16 %v283
      %v564 = vunpack.c.h.b16 %v283
      %v565 = vunpack.c.l.b16 %v284
      %v566 = vunpack.c.l.b16 %v285
      %v567 = vunpack.c.h.b16 %v285
      %v568 = vunpack.c.l.b16 %v286
      %v569 = vunpack.c.l.b16 %v287
      %v570 = vunpack.c.h.b16 %v287
      %v571 = vunpack.c.l.b16 %v288
      %v572 = vunpack.c.l.b16 %v289
      %v573 = vunpack.c.h.b16 %v289
      %v574 = vunpack.c.l.b16 %v290
      %v575 = vunpack.c.l.b16 %v291
      %v576 = vunpack.c.h.b16 %v291
      %v577 = vunpack.c.l.b16 %v292
      %v578 = vunpack.c.l.b16 %v293
      %v579 = vunpack.c.h.b16 %v293
      %v580 = vunpack.c.l.b16 %v294
      %v581 = vunpack.c.l.b16 %v295
      %v582 = vunpack.c.h.b16 %v295
      %v583 = vunpack.c.l.b16 %v296
      %v584 = vunpack.c.l.b16 %v297
      %v585 = vunpack.c.h.b16 %v297
      %v586 = vunpack.c.l.b16 %v298
      %v587 = vunpack.c.l.b16 %v299
      %v588 = vunpack.c.h.b16 %v299
      %v589 = vunpack.c.l.b16 %v300
      %v590 = vunpack.c.l.b16 %v301
      %v591 = vunpack.c.h.b16 %v301
      %v592 = vunpack.c.l.b16 %v302
      %v593 = vunpack.c.l.b16 %v303
      %v594 = vunpack.c.h.b16 %v303
      %v595 = vunpack.c.l.b16 %v304
      %v596 = vunpack.c.l.b16 %v305
      %v597 = vunpack.c.h.b16 %v305
      %v598 = vunpack.c.l.b16 %v306
      %v599 = vunpack.c.l.b16 %v307
      %v600 = vunpack.c.h.b16 %v307
      %v601 = vunpack.c.l.b16 %v308
      %v602 = vunpack.c.l.b16 %v309
      %v603 = vunpack.c.h.b16 %v309
      %v604 = vunpack.c.l.b16 %v310
      %v605 = vunpack.c.l.b16 %v311
      %v606 = vunpack.c.h.b16 %v311
      %v607 = vunpack.c.l.b16 %v312
      %v608 = vunpack.c.l.b16 %v313
      %v609 = vunpack.c.h.b16 %v313
      %v610 = vunpack.c.l.b16 %v314
      %v611 = vunpack.c.l.b16 %v315
      %v612 = vunpack.c.h.b16 %v315
      %v613 = vunpack.c.l.b16 %v316
      %v614 = vpack.c.b16 %v521, %v518
      %v615 = vpack.c.b16 %v522, %v519
      %v616 = vpack.c.b16 %v523, %v520
      %v617 = vpack.c.b16 %v527, %v524
      %v618 = vpack.c.b16 %v528, %v525
      %v619 = vpack.c.b16 %v529, %v526
      %v620 = vpack.c.b16 %v533, %v530
      %v621 = vpack.c.b16 %v534, %v531
      %v622 = vpack.c.b16 %v535, %v532
      %v623 = vpack.c.b16 %v539, %v536
      %v624 = vpack.c.b16 %v540, %v537
      %v625 = vpack.c.b16 %v541, %v538
      %v626 = vpack.c.b16 %v545, %v542
      %v627 = vpack.c.b16 %v546, %v543
      %v628 = vpack.c.b16 %v547, %v544
      %v629 = vpack.c.b16 %v551, %v548
      %v630 = vpack.c.b16 %v552, %v549
      %v631 = vpack.c.b16 %v553, %v550
      %v632 = vpack.c.b16 %v557, %v554
      %v633 = vpack.c.b16 %v558, %v555
      %v634 = vpack.c.b16 %v559, %v556
      %v635 = vpack.c.b16 %v563, %v560
      %v636 = vpack.c.b16 %v564, %v561
      %v637 = vpack.c.b16 %v565, %v562
      %v638 = vpack.c.b16 %v569, %v566
      %v639 = vpack.c.b16 %v570, %v567
      %v640 = vpack.c.b16 %v571, %v568
      %v641 = vpack.c.b16 %v575, %v572
      %v642 = vpack.c.b16 %v576, %v573
      %v643 = vpack.c.b16 %v577, %v574
      %v644 = vpack.c.b16 %v581, %v578
      %v645 = vpack.c.b16 %v582, %v579
      %v646 = vpack.c.b16 %v583, %v580
      %v647 = vpack.c.b16 %v587, %v584
      %v648 = vpack.c.b16 %v588, %v585
      %v649 = vpack.c.b16 %v589, %v586
      %v650 = vpack.c.b16 %v593, %v590
      %v651 = vpack.c.b16 %v594, %v591
      %v652 = vpack.c.b16 %v595, %v592
      %v653 = vpack.c.b16 %v599, %v596
      %v654 = vpack.c.b16 %v600, %v597
      %v655 = vpack.c.b16 %v601, %v598
      %v656 = vpack.c.b16 %v605, %v602
      %v657 = vpack.c.b16 %v606, %v603
      %v658 = vpack.c.b16 %v607, %v604
      %v659 = vpack.c.b16 %v611, %v608
      %v660 = vpack.c.b16 %v612, %v609
      %v661 = vpack.c.b16 %v613, %v610
      %710 = vmatprep.subr.bf16.mxu0 %v615
      %711 = vmatpush1.bf16.msra.mxu0 %v614
      %712 = vmatprep.subr.bf16.mxu0 %v618
      %713 = vmatpush1.bf16.msra.mxu0 %v617
      %714 = vmatprep.subr.bf16.mxu0 %v621
      %715 = vmatpush1.bf16.msra.mxu0 %v620
      %716 = vmatprep.subr.bf16.mxu0 %v624
      %717 = vmatpush1.bf16.msra.mxu0 %v623
      %718 = vmatprep.subr.bf16.mxu0 %v627
      %719 = vmatpush1.bf16.msra.mxu0 %v626
      %720 = vmatprep.subr.bf16.mxu0 %v630
      %721 = vmatpush1.bf16.msra.mxu0 %v629
      %722 = vmatprep.subr.bf16.mxu0 %v633
      %723 = vmatpush1.bf16.msra.mxu0 %v632
      %724 = vmatprep.subr.bf16.mxu0 %v636
      %725 = vmatpush1.bf16.msra.mxu0 %v635
      %726 = vmatprep.subr.bf16.mxu0 %v639
      %727 = vmatpush1.bf16.msra.mxu0 %v638
      %728 = vmatprep.subr.bf16.mxu0 %v642
      %729 = vmatpush1.bf16.msra.mxu0 %v641
      %730 = vmatprep.subr.bf16.mxu0 %v645
      %731 = vmatpush1.bf16.msra.mxu0 %v644
      %732 = vmatprep.subr.bf16.mxu0 %v648
      %733 = vmatpush1.bf16.msra.mxu0 %v647
      %734 = vmatprep.subr.bf16.mxu0 %v651
      %735 = vmatpush1.bf16.msra.mxu0 %v650
      %736 = vmatprep.subr.bf16.mxu0 %v654
      %737 = vmatpush1.bf16.msra.mxu0 %v653
      %738 = vmatprep.subr.bf16.mxu0 %v657
      %739 = vmatpush1.bf16.msra.mxu0 %v656
      %740 = vmatprep.subr.bf16.mxu0 %v660
      %741 = vmatpush1.bf16.msra.mxu0 %v659
      %742 = vmatprep.mubr.bf16.mxu0 %v407
      %743 = vmatmul.mubr.bf16.gmra.mrb[0].mxu0 %v406
      %v744 = vpop.f32.mrb[0].mxu0
      %v745 = vadd.f32 %v322, %v744
      %v746 = vpop.f32.mrb[0].mxu0
      %v747 = vadd.f32 %v326, %v746
      %v748 = vpop.f32.mrb[0].mxu0
      %v749 = vadd.f32 %v322, %v748
      %v750 = vpop.f32.mrb[0].mxu0
      %v751 = vadd.f32 %v326, %v750
      %752 = vmatprep.mubr.bf16.mxu0 %v409
      %753 = vmatmul.mubr.bf16.gmra.mrb[0].mxu0 %v408
      %v754 = vpop.f32.mrb[0].mxu0
      %v755 = vadd.f32 %v322, %v754
      %v756 = vpop.f32.mrb[0].mxu0
      %v757 = vadd.f32 %v326, %v756
      %v758 = vpop.f32.mrb[0].mxu0
      %v759 = vadd.f32 %v322, %v758
      %v760 = vpop.f32.mrb[0].mxu0
      %v761 = vadd.f32 %v326, %v760
      %762 = vmatprep.mubr.bf16.mxu0 %v411
      %763 = vmatmul.mubr.bf16.gmra.mrb[0].mxu0 %v410
      %v764 = vpop.f32.mrb[0].mxu0
      %v765 = vadd.f32 %v322, %v764
      %v766 = vpop.f32.mrb[0].mxu0
      %v767 = vadd.f32 %v326, %v766
      %v768 = vpop.f32.mrb[0].mxu0
      %v769 = vadd.f32 %v322, %v768
      %v770 = vpop.f32.mrb[0].mxu0
      %v771 = vadd.f32 %v326, %v770
      %772 = vmatprep.mubr.bf16.mxu0 %v413
      %773 = vmatmul.mubr.bf16.gmra.mrb[0].mxu0 %v412
      %v774 = vpop.f32.mrb[0].mxu0
      %v775 = vadd.f32 %v322, %v774
      %v776 = vpop.f32.mrb[0].mxu0
      %v777 = vadd.f32 %v326, %v776
      %v778 = vpop.f32.mrb[0].mxu0
      %v779 = vadd.f32 %v322, %v778
      %v780 = vpop.f32.mrb[0].mxu0
      %v781 = vadd.f32 %v326, %v780
      %782 = vmatprep.mubr.bf16.mxu0 %v415
      %783 = vmatmul.mubr.bf16.gmra.mrb[0].mxu0 %v414
      %v784 = vpop.f32.mrb[0].mxu0
      %v785 = vadd.f32 %v322, %v784
      %v786 = vpop.f32.mrb[0].mxu0
      %v787 = vadd.f32 %v326, %v786
      %v788 = vpop.f32.mrb[0].mxu0
      %v789 = vadd.f32 %v322, %v788
      %v790 = vpop.f32.mrb[0].mxu0
      %v791 = vadd.f32 %v326, %v790
      %792 = vmatprep.mubr.bf16.mxu0 %v417
      %793 = vmatmul.mubr.bf16.gmra.mrb[0].mxu0 %v416
      %v794 = vpop.f32.mrb[0].mxu0
      %v795 = vadd.f32 %v322, %v794
      %v796 = vpop.f32.mrb[0].mxu0
      %v797 = vadd.f32 %v326, %v796
      %v798 = vpop.f32.mrb[0].mxu0
      %v799 = vadd.f32 %v322, %v798
      %v800 = vpop.f32.mrb[0].mxu0
      %v801 = vadd.f32 %v326, %v800
      %802 = vmatprep.mubr.bf16.mxu0 %v419
      %803 = vmatmul.mubr.bf16.gmra.mrb[0].mxu0 %v418
      %v804 = vpop.f32.mrb[0].mxu0
      %v805 = vadd.f32 %v322, %v804
      %v806 = vpop.f32.mrb[0].mxu0
      %v807 = vadd.f32 %v326, %v806
      %v808 = vpop.f32.mrb[0].mxu0
      %v809 = vadd.f32 %v322, %v808
      %v810 = vpop.f32.mrb[0].mxu0
      %v811 = vadd.f32 %v326, %v810
      %812 = vmatprep.mubr.bf16.mxu0 %v421
      %813 = vmatmul.mubr.bf16.gmra.mrb[0].mxu0 %v420
      %v814 = vpop.f32.mrb[0].mxu0
      %v815 = vadd.f32 %v322, %v814
      %v816 = vpop.f32.mrb[0].mxu0
      %v817 = vadd.f32 %v326, %v816
      %v818 = vpop.f32.mrb[0].mxu0
      %v819 = vadd.f32 %v322, %v818
      %v820 = vpop.f32.mrb[0].mxu0
      %v821 = vadd.f32 %v326, %v820
      %822 = vmatprep.mubr.bf16.mxu0 %v423
      %823 = vmatmul.mubr.bf16.gmra.mrb[0].mxu0 %v422
      %v824 = vpop.f32.mrb[0].mxu0
      %v825 = vadd.f32 %v322, %v824
      %v826 = vpop.f32.mrb[0].mxu0
      %v827 = vadd.f32 %v326, %v826
      %v828 = vpop.f32.mrb[0].mxu0
      %v829 = vadd.f32 %v322, %v828
      %v830 = vpop.f32.mrb[0].mxu0
      %v831 = vadd.f32 %v326, %v830
      %832 = vmatprep.mubr.bf16.mxu0 %v425
      %833 = vmatmul.mubr.bf16.gmra.mrb[0].mxu0 %v424
      %v834 = vpop.f32.mrb[0].mxu0
      %v835 = vadd.f32 %v322, %v834
      %v836 = vpop.f32.mrb[0].mxu0
      %v837 = vadd.f32 %v326, %v836
      %v838 = vpop.f32.mrb[0].mxu0
      %v839 = vadd.f32 %v322, %v838
      %v840 = vpop.f32.mrb[0].mxu0
      %v841 = vadd.f32 %v326, %v840
      %842 = vmatprep.mubr.bf16.mxu0 %v427
      %843 = vmatmul.mubr.bf16.gmra.mrb[0].mxu0 %v426
      %v844 = vpop.f32.mrb[0].mxu0
      %v845 = vadd.f32 %v322, %v844
      %v846 = vpop.f32.mrb[0].mxu0
      %v847 = vadd.f32 %v326, %v846
      %v848 = vpop.f32.mrb[0].mxu0
      %v849 = vadd.f32 %v322, %v848
      %v850 = vpop.f32.mrb[0].mxu0
      %v851 = vadd.f32 %v326, %v850
      %852 = vmatprep.mubr.bf16.mxu0 %v429
      %853 = vmatmul.mubr.bf16.gmra.mrb[0].mxu0 %v428
      %v854 = vpop.f32.mrb[0].mxu0
      %v855 = vadd.f32 %v322, %v854
      %v856 = vpop.f32.mrb[0].mxu0
      %v857 = vadd.f32 %v326, %v856
      %v858 = vpop.f32.mrb[0].mxu0
      %v859 = vadd.f32 %v322, %v858
      %v860 = vpop.f32.mrb[0].mxu0
      %v861 = vadd.f32 %v326, %v860
      %862 = vdwg.mxu0
      %863 = vmatprep.subr.bf16.mxu0 0
      %864 = vmatpush1.bf16.msra.mxu0 %v616
      %865 = vmatprep.subr.bf16.mxu0 0
      %866 = vmatpush1.bf16.msra.mxu0 %v619
      %867 = vmatprep.subr.bf16.mxu0 0
      %868 = vmatpush1.bf16.msra.mxu0 %v622
      %869 = vmatprep.subr.bf16.mxu0 0
      %870 = vmatpush1.bf16.msra.mxu0 %v625
      %871 = vmatprep.subr.bf16.mxu0 0
      %872 = vmatpush1.bf16.msra.mxu0 %v628
      %873 = vmatprep.subr.bf16.mxu0 0
      %874 = vmatpush1.bf16.msra.mxu0 %v631
      %875 = vmatprep.subr.bf16.mxu0 0
      %876 = vmatpush1.bf16.msra.mxu0 %v634
      %877 = vmatprep.subr.bf16.mxu0 0
      %878 = vmatpush1.bf16.msra.mxu0 %v637
      %879 = vmatprep.subr.bf16.mxu0 0
      %880 = vmatpush1.bf16.msra.mxu0 %v640
      %881 = vmatprep.subr.bf16.mxu0 0
      %882 = vmatpush1.bf16.msra.mxu0 %v643
      %883 = vmatprep.subr.bf16.mxu0 0
      %884 = vmatpush1.bf16.msra.mxu0 %v646
      %885 = vmatprep.subr.bf16.mxu0 0
      %886 = vmatpush1.bf16.msra.mxu0 %v649
      %887 = vmatprep.subr.bf16.mxu0 0
      %888 = vmatpush1.bf16.msra.mxu0 %v652
      %889 = vmatprep.subr.bf16.mxu0 0
      %890 = vmatpush1.bf16.msra.mxu0 %v655
      %891 = vmatprep.subr.bf16.mxu0 0
      %892 = vmatpush1.bf16.msra.mxu0 %v658
      %893 = vmatprep.subr.bf16.mxu0 0
      %894 = vmatpush1.bf16.msra.mxu0 %v661
      %895 = vmatprep.mubr.bf16.mxu0 %v407
      %896 = vmatmul.mubr.bf16.gmra.mrb[0].mxu0 %v406
      %v897 = vpop.f32.mrb[0].mxu0
      %v898 = vadd.f32 %v330, %v897
      %v899 = vpop.f32.mrb[0].mxu0
      %v900 = vpop.f32.mrb[0].mxu0
      %v901 = vadd.f32 %v330, %v900
      %v902 = vpop.f32.mrb[0].mxu0
      %903 = vmatprep.mubr.bf16.mxu0 %v409
      %904 = vmatmul.mubr.bf16.gmra.mrb[0].mxu0 %v408
      %v905 = vpop.f32.mrb[0].mxu0
      %v906 = vadd.f32 %v330, %v905
      %v907 = vpop.f32.mrb[0].mxu0
      %v908 = vpop.f32.mrb[0].mxu0
      %v909 = vadd.f32 %v330, %v908
      %v910 = vpop.f32.mrb[0].mxu0
      %911 = vmatprep.mubr.bf16.mxu0 %v411
      %912 = vmatmul.mubr.bf16.gmra.mrb[0].mxu0 %v410
      %v913 = vpop.f32.mrb[0].mxu0
      %v914 = vadd.f32 %v330, %v913
      %v915 = vpop.f32.mrb[0].mxu0
      %v916 = vpop.f32.mrb[0].mxu0
      %v917 = vadd.f32 %v330, %v916
      %v918 = vpop.f32.mrb[0].mxu0
      %919 = vmatprep.mubr.bf16.mxu0 %v413
      %920 = vmatmul.mubr.bf16.gmra.mrb[0].mxu0 %v412
      %v921 = vpop.f32.mrb[0].mxu0
      %v922 = vadd.f32 %v330, %v921
      %v923 = vpop.f32.mrb[0].mxu0
      %v924 = vpop.f32.mrb[0].mxu0
      %v925 = vadd.f32 %v330, %v924
      %v926 = vpop.f32.mrb[0].mxu0
      %927 = vmatprep.mubr.bf16.mxu0 %v415
      %928 = vmatmul.mubr.bf16.gmra.mrb[0].mxu0 %v414
      %v929 = vpop.f32.mrb[0].mxu0
      %v930 = vadd.f32 %v330, %v929
      %v931 = vpop.f32.mrb[0].mxu0
      %v932 = vpop.f32.mrb[0].mxu0
      %v933 = vadd.f32 %v330, %v932
      %v934 = vpop.f32.mrb[0].mxu0
      %935 = vmatprep.mubr.bf16.mxu0 %v417
      %936 = vmatmul.mubr.bf16.gmra.mrb[0].mxu0 %v416
      %v937 = vpop.f32.mrb[0].mxu0
      %v938 = vadd.f32 %v330, %v937
      %v939 = vpop.f32.mrb[0].mxu0
      %v940 = vpop.f32.mrb[0].mxu0
      %v941 = vadd.f32 %v330, %v940
      %v942 = vpop.f32.mrb[0].mxu0
      %943 = vmatprep.mubr.bf16.mxu0 %v419
      %944 = vmatmul.mubr.bf16.gmra.mrb[0].mxu0 %v418
      %v945 = vpop.f32.mrb[0].mxu0
      %v946 = vadd.f32 %v330, %v945
      %v947 = vpop.f32.mrb[0].mxu0
      %v948 = vpop.f32.mrb[0].mxu0
      %v949 = vadd.f32 %v330, %v948
      %v950 = vpop.f32.mrb[0].mxu0
      %951 = vmatprep.mubr.bf16.mxu0 %v421
      %952 = vmatmul.mubr.bf16.gmra.mrb[0].mxu0 %v420
      %v953 = vpop.f32.mrb[0].mxu0
      %v954 = vadd.f32 %v330, %v953
      %v955 = vpop.f32.mrb[0].mxu0
      %v956 = vpop.f32.mrb[0].mxu0
      %v957 = vadd.f32 %v330, %v956
      %v958 = vpop.f32.mrb[0].mxu0
      %959 = vmatprep.mubr.bf16.mxu0 %v423
      %960 = vmatmul.mubr.bf16.gmra.mrb[0].mxu0 %v422
      %v961 = vpop.f32.mrb[0].mxu0
      %v962 = vadd.f32 %v330, %v961
      %v963 = vpop.f32.mrb[0].mxu0
      %v964 = vpop.f32.mrb[0].mxu0
      %v965 = vadd.f32 %v330, %v964
      %v966 = vpop.f32.mrb[0].mxu0
      %967 = vmatprep.mubr.bf16.mxu0 %v425
      %968 = vmatmul.mubr.bf16.gmra.mrb[0].mxu0 %v424
      %v969 = vpop.f32.mrb[0].mxu0
      %v970 = vadd.f32 %v330, %v969
      %v971 = vpop.f32.mrb[0].mxu0
      %v972 = vpop.f32.mrb[0].mxu0
      %v973 = vadd.f32 %v330, %v972
      %v974 = vpop.f32.mrb[0].mxu0
      %975 = vmatprep.mubr.bf16.mxu0 %v427
      %976 = vmatmul.mubr.bf16.gmra.mrb[0].mxu0 %v426
      %v977 = vpop.f32.mrb[0].mxu0
      %v978 = vadd.f32 %v330, %v977
      %v979 = vpop.f32.mrb[0].mxu0
      %v980 = vpop.f32.mrb[0].mxu0
      %v981 = vadd.f32 %v330, %v980
      %v982 = vpop.f32.mrb[0].mxu0
      %983 = vmatprep.mubr.bf16.mxu0 %v429
      %984 = vmatmul.mubr.bf16.gmra.mrb[0].mxu0 %v428
      %v985 = vpop.f32.mrb[0].mxu0
      %v986 = vadd.f32 %v330, %v985
      %v987 = vpop.f32.mrb[0].mxu0
      %v988 = vpop.f32.mrb[0].mxu0
      %v989 = vadd.f32 %v330, %v988
      %v990 = vpop.f32.mrb[0].mxu0
      %991 = vdwg.mxu0
      %v992 = vmax.f32 %v745, 0.0
      %v993 = vmax.f32 %v747, 0.0
      %v994 = vmax.f32 %v898, 0.0
      %v995 = vmax.f32 %v749, 0.0
      %v996 = vmax.f32 %v751, 0.0
      %v997 = vmax.f32 %v901, 0.0
      %v998 = vmax.f32 %v755, 0.0
      %v999 = vmax.f32 %v757, 0.0
      %v1000 = vmax.f32 %v906, 0.0
      %v1001 = vmax.f32 %v759, 0.0
      %v1002 = vmax.f32 %v761, 0.0
      %v1003 = vmax.f32 %v909, 0.0
      %v1004 = vmax.f32 %v765, 0.0
      %v1005 = vmax.f32 %v767, 0.0
      %v1006 = vmax.f32 %v914, 0.0
      %v1007 = vmax.f32 %v769, 0.0
      %v1008 = vmax.f32 %v771, 0.0
      %v1009 = vmax.f32 %v917, 0.0
      %v1010 = vmax.f32 %v775, 0.0
      %v1011 = vmax.f32 %v777, 0.0
      %v1012 = vmax.f32 %v922, 0.0
      %v1013 = vmax.f32 %v779, 0.0
      %v1014 = vmax.f32 %v781, 0.0
      %v1015 = vmax.f32 %v925, 0.0
      %v1016 = vmax.f32 %v785, 0.0
      %v1017 = vmax.f32 %v787, 0.0
      %v1018 = vmax.f32 %v930, 0.0
      %v1019 = vmax.f32 %v789, 0.0
      %v1020 = vmax.f32 %v791, 0.0
      %v1021 = vmax.f32 %v933, 0.0
      %v1022 = vmax.f32 %v795, 0.0
      %v1023 = vmax.f32 %v797, 0.0
      %v1024 = vmax.f32 %v938, 0.0
      %v1025 = vmax.f32 %v799, 0.0
      %v1026 = vmax.f32 %v801, 0.0
      %v1027 = vmax.f32 %v941, 0.0
      %v1028 = vmax.f32 %v805, 0.0
      %v1029 = vmax.f32 %v807, 0.0
      %v1030 = vmax.f32 %v946, 0.0
      %v1031 = vmax.f32 %v809, 0.0
      %v1032 = vmax.f32 %v811, 0.0
      %v1033 = vmax.f32 %v949, 0.0
      %v1034 = vmax.f32 %v815, 0.0
      %v1035 = vmax.f32 %v817, 0.0
      %v1036 = vmax.f32 %v954, 0.0
      %v1037 = vmax.f32 %v819, 0.0
      %v1038 = vmax.f32 %v821, 0.0
      %v1039 = vmax.f32 %v957, 0.0
      %v1040 = vmax.f32 %v825, 0.0
      %v1041 = vmax.f32 %v827, 0.0
      %v1042 = vmax.f32 %v962, 0.0
      %v1043 = vmax.f32 %v829, 0.0
      %v1044 = vmax.f32 %v831, 0.0
      %v1045 = vmax.f32 %v965, 0.0
      %v1046 = vmax.f32 %v835, 0.0
      %v1047 = vmax.f32 %v837, 0.0
      %v1048 = vmax.f32 %v970, 0.0
      %v1049 = vmax.f32 %v839, 0.0
      %v1050 = vmax.f32 %v841, 0.0
      %v1051 = vmax.f32 %v973, 0.0
      %v1052 = vmax.f32 %v845, 0.0
      %v1053 = vmax.f32 %v847, 0.0
      %v1054 = vmax.f32 %v978, 0.0
      %v1055 = vmax.f32 %v849, 0.0
      %v1056 = vmax.f32 %v851, 0.0
      %v1057 = vmax.f32 %v981, 0.0
      %v1058 = vmax.f32 %v855, 0.0
      %v1059 = vmax.f32 %v857, 0.0
      %v1060 = vmax.f32 %v986, 0.0
      %v1061 = vmax.f32 %v859, 0.0
      %v1062 = vmax.f32 %v861, 0.0
      %v1063 = vmax.f32 %v989, 0.0
      %v1064 = vlaneseq
      %v1065 = vshrl.u32 %v1064, 7
      %v1066 = vadd.s32 %v1065, 8
      %v1067 = vadd.s32 %v1065, 16
      %vm1068 = vcmp.lt.s32.totalorder %v1065, 19
      %vm1069 = vcmp.lt.s32.totalorder %v1066, 19
      %vm1070 = vcmp.lt.s32.totalorder %v1067, 19
      %v1071 = vsel %vm1068, 1, 0
      %v1072 = vsel %vm1069, 1, 0
      %v1073 = vsel %vm1070, 1, 0
      %vm1074 = vcmp.eq.s32.totalorder %v1071, 1
      %vm1075 = vcmp.eq.s32.totalorder %v1072, 1
      %vm1076 = vcmp.eq.s32.totalorder %v1073, 1
      %v1077 = vsel %vm1074, %v992, 0.0
      %v1078 = vsel %vm1074, %v993, 0.0
      %v1079 = vsel %vm1074, %v994, 0.0
      %v1080 = vsel %vm1075, %v995, 0.0
      %v1081 = vsel %vm1075, %v996, 0.0
      %v1082 = vsel %vm1075, %v997, 0.0
      %v1083 = vsel %vm1076, %v998, 0.0
      %v1084 = vsel %vm1076, %v999, 0.0
      %v1085 = vsel %vm1076, %v1000, 0.0
      %v1086 = vsel %vm1074, %v1001, 0.0
      %v1087 = vsel %vm1074, %v1002, 0.0
      %v1088 = vsel %vm1074, %v1003, 0.0
      %v1089 = vsel %vm1075, %v1004, 0.0
      %v1090 = vsel %vm1075, %v1005, 0.0
      %v1091 = vsel %vm1075, %v1006, 0.0
      %v1092 = vsel %vm1076, %v1007, 0.0
      %v1093 = vsel %vm1076, %v1008, 0.0
      %v1094 = vsel %vm1076, %v1009, 0.0
      %v1095 = vsel %vm1074, %v1010, 0.0
      %v1096 = vsel %vm1074, %v1011, 0.0
      %v1097 = vsel %vm1074, %v1012, 0.0
      %v1098 = vsel %vm1075, %v1013, 0.0
      %v1099 = vsel %vm1075, %v1014, 0.0
      %v1100 = vsel %vm1075, %v1015, 0.0
      %v1101 = vsel %vm1076, %v1016, 0.0
      %v1102 = vsel %vm1076, %v1017, 0.0
      %v1103 = vsel %vm1076, %v1018, 0.0
      %v1104 = vsel %vm1074, %v1019, 0.0
      %v1105 = vsel %vm1074, %v1020, 0.0
      %v1106 = vsel %vm1074, %v1021, 0.0
      %v1107 = vsel %vm1075, %v1022, 0.0
      %v1108 = vsel %vm1075, %v1023, 0.0
      %v1109 = vsel %vm1075, %v1024, 0.0
      %v1110 = vsel %vm1076, %v1025, 0.0
      %v1111 = vsel %vm1076, %v1026, 0.0
      %v1112 = vsel %vm1076, %v1027, 0.0
      %v1113 = vsel %vm1074, %v1028, 0.0
      %v1114 = vsel %vm1074, %v1029, 0.0
      %v1115 = vsel %vm1074, %v1030, 0.0
      %v1116 = vsel %vm1075, %v1031, 0.0
      %v1117 = vsel %vm1075, %v1032, 0.0
      %v1118 = vsel %vm1075, %v1033, 0.0
      %v1119 = vsel %vm1076, %v1034, 0.0
      %v1120 = vsel %vm1076, %v1035, 0.0
      %v1121 = vsel %vm1076, %v1036, 0.0
      %v1122 = vsel %vm1074, %v1037, 0.0
      %v1123 = vsel %vm1074, %v1038, 0.0
      %v1124 = vsel %vm1074, %v1039, 0.0
      %v1125 = vsel %vm1075, %v1040, 0.0
      %v1126 = vsel %vm1075, %v1041, 0.0
      %v1127 = vsel %vm1075, %v1042, 0.0
      %v1128 = vsel %vm1076, %v1043, 0.0
      %v1129 = vsel %vm1076, %v1044, 0.0
      %v1130 = vsel %vm1076, %v1045, 0.0
      %v1131 = vsel %vm1074, %v1046, 0.0
      %v1132 = vsel %vm1074, %v1047, 0.0
      %v1133 = vsel %vm1074, %v1048, 0.0
      %v1134 = vsel %vm1075, %v1049, 0.0
      %v1135 = vsel %vm1075, %v1050, 0.0
      %v1136 = vsel %vm1075, %v1051, 0.0
      %v1137 = vsel %vm1076, %v1052, 0.0
      %v1138 = vsel %vm1076, %v1053, 0.0
      %v1139 = vsel %vm1076, %v1054, 0.0
      %v1140 = vsel %vm1074, %v1055, 0.0
      %v1141 = vsel %vm1074, %v1056, 0.0
      %v1142 = vsel %vm1074, %v1057, 0.0
      %v1143 = vsel %vm1075, %v1058, 0.0
      %v1144 = vsel %vm1075, %v1059, 0.0
      %v1145 = vsel %vm1075, %v1060, 0.0
      %v1146 = vsel %vm1076, %v1061, 0.0
      %v1147 = vsel %vm1076, %v1062, 0.0
      %v1148 = vsel %vm1076, %v1063, 0.0
      %v1149 = vmax.f32 %v1077, %v1080
      %v1150 = vmax.f32 %v1149, %v1083
      %v1151 = vrot.slane %v1150, 4
      %v1152 = vmax.f32 %v1150, %v1151
      %v1153 = vrot.slane %v1152, 2
      %v1154 = vmax.f32 %v1152, %v1153
      %v1155 = vrot.slane %v1154, 1
      %v1156 = vmax.f32 %v1154, %v1155
      %v1157 = vmax.f32 %v1078, %v1081
      %v1158 = vmax.f32 %v1157, %v1084
      %v1159 = vrot.slane %v1158, 4
      %v1160 = vmax.f32 %v1158, %v1159
      %v1161 = vrot.slane %v1160, 2
      %v1162 = vmax.f32 %v1160, %v1161
      %v1163 = vrot.slane %v1162, 1
      %v1164 = vmax.f32 %v1162, %v1163
      %v1165 = vmax.f32 %v1079, %v1082
      %v1166 = vmax.f32 %v1165, %v1085
      %v1167 = vrot.slane %v1166, 4
      %v1168 = vmax.f32 %v1166, %v1167
      %v1169 = vrot.slane %v1168, 2
      %v1170 = vmax.f32 %v1168, %v1169
      %v1171 = vrot.slane %v1170, 1
      %v1172 = vmax.f32 %v1170, %v1171
      %v1173 = vmax.f32 %v1086, %v1089
      %v1174 = vmax.f32 %v1173, %v1092
      %v1175 = vrot.slane %v1174, 4
      %v1176 = vmax.f32 %v1174, %v1175
      %v1177 = vrot.slane %v1176, 2
      %v1178 = vmax.f32 %v1176, %v1177
      %v1179 = vrot.slane %v1178, 1
      %v1180 = vmax.f32 %v1178, %v1179
      %v1181 = vmax.f32 %v1087, %v1090
      %v1182 = vmax.f32 %v1181, %v1093
      %v1183 = vrot.slane %v1182, 4
      %v1184 = vmax.f32 %v1182, %v1183
      %v1185 = vrot.slane %v1184, 2
      %v1186 = vmax.f32 %v1184, %v1185
      %v1187 = vrot.slane %v1186, 1
      %v1188 = vmax.f32 %v1186, %v1187
      %v1189 = vmax.f32 %v1088, %v1091
      %v1190 = vmax.f32 %v1189, %v1094
      %v1191 = vrot.slane %v1190, 4
      %v1192 = vmax.f32 %v1190, %v1191
      %v1193 = vrot.slane %v1192, 2
      %v1194 = vmax.f32 %v1192, %v1193
      %v1195 = vrot.slane %v1194, 1
      %v1196 = vmax.f32 %v1194, %v1195
      %v1197 = vmax.f32 %v1095, %v1098
      %v1198 = vmax.f32 %v1197, %v1101
      %v1199 = vrot.slane %v1198, 4
      %v1200 = vmax.f32 %v1198, %v1199
      %v1201 = vrot.slane %v1200, 2
      %v1202 = vmax.f32 %v1200, %v1201
      %v1203 = vrot.slane %v1202, 1
      %v1204 = vmax.f32 %v1202, %v1203
      %v1205 = vmax.f32 %v1096, %v1099
      %v1206 = vmax.f32 %v1205, %v1102
      %v1207 = vrot.slane %v1206, 4
      %v1208 = vmax.f32 %v1206, %v1207
      %v1209 = vrot.slane %v1208, 2
      %v1210 = vmax.f32 %v1208, %v1209
      %v1211 = vrot.slane %v1210, 1
      %v1212 = vmax.f32 %v1210, %v1211
      %v1213 = vmax.f32 %v1097, %v1100
      %v1214 = vmax.f32 %v1213, %v1103
      %v1215 = vrot.slane %v1214, 4
      %v1216 = vmax.f32 %v1214, %v1215
      %v1217 = vrot.slane %v1216, 2
      %v1218 = vmax.f32 %v1216, %v1217
      %v1219 = vrot.slane %v1218, 1
      %v1220 = vmax.f32 %v1218, %v1219
      %v1221 = vmax.f32 %v1104, %v1107
      %v1222 = vmax.f32 %v1221, %v1110
      %v1223 = vrot.slane %v1222, 4
      %v1224 = vmax.f32 %v1222, %v1223
      %v1225 = vrot.slane %v1224, 2
      %v1226 = vmax.f32 %v1224, %v1225
      %v1227 = vrot.slane %v1226, 1
      %v1228 = vmax.f32 %v1226, %v1227
      %v1229 = vmax.f32 %v1105, %v1108
      %v1230 = vmax.f32 %v1229, %v1111
      %v1231 = vrot.slane %v1230, 4
      %v1232 = vmax.f32 %v1230, %v1231
      %v1233 = vrot.slane %v1232, 2
      %v1234 = vmax.f32 %v1232, %v1233
      %v1235 = vrot.slane %v1234, 1
      %v1236 = vmax.f32 %v1234, %v1235
      %v1237 = vmax.f32 %v1106, %v1109
      %v1238 = vmax.f32 %v1237, %v1112
      %v1239 = vrot.slane %v1238, 4
      %v1240 = vmax.f32 %v1238, %v1239
      %v1241 = vrot.slane %v1240, 2
      %v1242 = vmax.f32 %v1240, %v1241
      %v1243 = vrot.slane %v1242, 1
      %v1244 = vmax.f32 %v1242, %v1243
      %v1245 = vmax.f32 %v1113, %v1116
      %v1246 = vmax.f32 %v1245, %v1119
      %v1247 = vrot.slane %v1246, 4
      %v1248 = vmax.f32 %v1246, %v1247
      %v1249 = vrot.slane %v1248, 2
      %v1250 = vmax.f32 %v1248, %v1249
      %v1251 = vrot.slane %v1250, 1
      %v1252 = vmax.f32 %v1250, %v1251
      %v1253 = vmax.f32 %v1114, %v1117
      %v1254 = vmax.f32 %v1253, %v1120
      %v1255 = vrot.slane %v1254, 4
      %v1256 = vmax.f32 %v1254, %v1255
      %v1257 = vrot.slane %v1256, 2
      %v1258 = vmax.f32 %v1256, %v1257
      %v1259 = vrot.slane %v1258, 1
      %v1260 = vmax.f32 %v1258, %v1259
      %v1261 = vmax.f32 %v1115, %v1118
      %v1262 = vmax.f32 %v1261, %v1121
      %v1263 = vrot.slane %v1262, 4
      %v1264 = vmax.f32 %v1262, %v1263
      %v1265 = vrot.slane %v1264, 2
      %v1266 = vmax.f32 %v1264, %v1265
      %v1267 = vrot.slane %v1266, 1
      %v1268 = vmax.f32 %v1266, %v1267
      %v1269 = vmax.f32 %v1122, %v1125
      %v1270 = vmax.f32 %v1269, %v1128
      %v1271 = vrot.slane %v1270, 4
      %v1272 = vmax.f32 %v1270, %v1271
      %v1273 = vrot.slane %v1272, 2
      %v1274 = vmax.f32 %v1272, %v1273
      %v1275 = vrot.slane %v1274, 1
      %v1276 = vmax.f32 %v1274, %v1275
      %v1277 = vmax.f32 %v1123, %v1126
      %v1278 = vmax.f32 %v1277, %v1129
      %v1279 = vrot.slane %v1278, 4
      %v1280 = vmax.f32 %v1278, %v1279
      %v1281 = vrot.slane %v1280, 2
      %v1282 = vmax.f32 %v1280, %v1281
      %v1283 = vrot.slane %v1282, 1
      %v1284 = vmax.f32 %v1282, %v1283
      %v1285 = vmax.f32 %v1124, %v1127
      %v1286 = vmax.f32 %v1285, %v1130
      %v1287 = vrot.slane %v1286, 4
      %v1288 = vmax.f32 %v1286, %v1287
      %v1289 = vrot.slane %v1288, 2
      %v1290 = vmax.f32 %v1288, %v1289
      %v1291 = vrot.slane %v1290, 1
      %v1292 = vmax.f32 %v1290, %v1291
      %v1293 = vmax.f32 %v1131, %v1134
      %v1294 = vmax.f32 %v1293, %v1137
      %v1295 = vrot.slane %v1294, 4
      %v1296 = vmax.f32 %v1294, %v1295
      %v1297 = vrot.slane %v1296, 2
      %v1298 = vmax.f32 %v1296, %v1297
      %v1299 = vrot.slane %v1298, 1
      %v1300 = vmax.f32 %v1298, %v1299
      %v1301 = vmax.f32 %v1132, %v1135
      %v1302 = vmax.f32 %v1301, %v1138
      %v1303 = vrot.slane %v1302, 4
      %v1304 = vmax.f32 %v1302, %v1303
      %v1305 = vrot.slane %v1304, 2
      %v1306 = vmax.f32 %v1304, %v1305
      %v1307 = vrot.slane %v1306, 1
      %v1308 = vmax.f32 %v1306, %v1307
      %v1309 = vmax.f32 %v1133, %v1136
      %v1310 = vmax.f32 %v1309, %v1139
      %v1311 = vrot.slane %v1310, 4
      %v1312 = vmax.f32 %v1310, %v1311
      %v1313 = vrot.slane %v1312, 2
      %v1314 = vmax.f32 %v1312, %v1313
      %v1315 = vrot.slane %v1314, 1
      %v1316 = vmax.f32 %v1314, %v1315
      %v1317 = vmax.f32 %v1140, %v1143
      %v1318 = vmax.f32 %v1317, %v1146
      %v1319 = vrot.slane %v1318, 4
      %v1320 = vmax.f32 %v1318, %v1319
      %v1321 = vrot.slane %v1320, 2
      %v1322 = vmax.f32 %v1320, %v1321
      %v1323 = vrot.slane %v1322, 1
      %v1324 = vmax.f32 %v1322, %v1323
      %v1325 = vmax.f32 %v1141, %v1144
      %v1326 = vmax.f32 %v1325, %v1147
      %v1327 = vrot.slane %v1326, 4
      %v1328 = vmax.f32 %v1326, %v1327
      %v1329 = vrot.slane %v1328, 2
      %v1330 = vmax.f32 %v1328, %v1329
      %v1331 = vrot.slane %v1330, 1
      %v1332 = vmax.f32 %v1330, %v1331
      %v1333 = vmax.f32 %v1142, %v1145
      %v1334 = vmax.f32 %v1333, %v1148
      %v1335 = vrot.slane %v1334, 4
      %v1336 = vmax.f32 %v1334, %v1335
      %v1337 = vrot.slane %v1336, 2
      %v1338 = vmax.f32 %v1336, %v1337
      %v1339 = vrot.slane %v1338, 1
      %v1340 = vmax.f32 %v1338, %v1339
      %v1341 = vpack.c.bf16 %v1156, %v1156
      %v1342 = vpack.c.bf16 %v1164, %v1164
      %v1343 = vpack.c.bf16 %v1172, %v1172
      %v1344 = vpack.c.bf16 %v1180, %v1180
      %v1345 = vpack.c.bf16 %v1188, %v1188
      %v1346 = vpack.c.bf16 %v1196, %v1196
      %v1347 = vpack.c.bf16 %v1204, %v1204
      %v1348 = vpack.c.bf16 %v1212, %v1212
      %v1349 = vpack.c.bf16 %v1220, %v1220
      %v1350 = vpack.c.bf16 %v1228, %v1228
      %v1351 = vpack.c.bf16 %v1236, %v1236
      %v1352 = vpack.c.bf16 %v1244, %v1244
      %v1353 = vpack.c.bf16 %v1252, %v1252
      %v1354 = vpack.c.bf16 %v1260, %v1260
      %v1355 = vpack.c.bf16 %v1268, %v1268
      %v1356 = vpack.c.bf16 %v1276, %v1276
      %v1357 = vpack.c.bf16 %v1284, %v1284
      %v1358 = vpack.c.bf16 %v1292, %v1292
      %v1359 = vpack.c.bf16 %v1300, %v1300
      %v1360 = vpack.c.bf16 %v1308, %v1308
      %v1361 = vpack.c.bf16 %v1316, %v1316
      %v1362 = vpack.c.bf16 %v1324, %v1324
      %v1363 = vpack.c.bf16 %v1332, %v1332
      %v1364 = vpack.c.bf16 %v1340, %v1340
      %v1365 = vld [vmem:[%s3] sm:$0xf]
      %v1366 = vld [vmem:[%s3 + $0x4] sm:$0xf]
      %v1367 = vld [vmem:[%s3 + $0x8] sm:$0xf]
      %v1368 = vld [vmem:[%s3 + $0xc] sm:$0xf]
      %v1369 = vld [vmem:[%s3 + $0x10] sm:$0xf]
      %v1370 = vld [vmem:[%s3 + $0x14] sm:$0xf]
      %v1371 = vld [vmem:[%s3 + $0x18] sm:$0xf]
      %v1372 = vld [vmem:[%s3 + $0x1c] sm:$0xf]
      %v1373 = vld [vmem:[%s3 + $0x20] sm:$0xf]
      %v1374 = vld [vmem:[%s3 + $0x24] sm:$0xf]
      %v1375 = vld [vmem:[%s3 + $0x28] sm:$0xf]
      %v1376 = vld [vmem:[%s3 + $0x2c] sm:$0xf]
      %v1377 = vld [vmem:[%s3 + $0x30] sm:$0xf]
      %v1378 = vld [vmem:[%s3 + $0x34] sm:$0xf]
      %v1379 = vld [vmem:[%s3 + $0x38] sm:$0xf]
      %v1380 = vld [vmem:[%s3 + $0x3c] sm:$0xf]
      %v1381 = vld [vmem:[%s3 + $0x40] sm:$0xf]
      %v1382 = vld [vmem:[%s3 + $0x44] sm:$0xf]
      %v1383 = vld [vmem:[%s3 + $0x48] sm:$0xf]
      %v1384 = vld [vmem:[%s3 + $0x4c] sm:$0xf]
      %v1385 = vld [vmem:[%s3 + $0x50] sm:$0xf]
      %v1386 = vld [vmem:[%s3 + $0x54] sm:$0xf]
      %v1387 = vld [vmem:[%s3 + $0x58] sm:$0xf]
      %v1388 = vld [vmem:[%s3 + $0x5c] sm:$0xf]
      %v1389 = vld [vmem:[%s3 + $0x60] sm:$0xf]
      %v1390 = vld [vmem:[%s3 + $0x64] sm:$0xf]
      %v1391 = vld [vmem:[%s3 + $0x68] sm:$0xf]
      %v1392 = vld [vmem:[%s3 + $0x6c] sm:$0xf]
      %v1393 = vld [vmem:[%s3 + $0x70] sm:$0xf]
      %v1394 = vld [vmem:[%s3 + $0x74] sm:$0xf]
      %v1395 = vld [vmem:[%s3 + $0x78] sm:$0xf]
      %v1396 = vld [vmem:[%s3 + $0x7c] sm:$0xf]
      %v1397 = vld [vmem:[%s3 + $0x80] sm:$0xf]
      %v1398 = vld [vmem:[%s3 + $0x84] sm:$0xf]
      %v1399 = vld [vmem:[%s3 + $0x88] sm:$0xf]
      %v1400 = vld [vmem:[%s3 + $0x8c] sm:$0xf]
      %v1401 = vld [vmem:[%s3 + $0x90] sm:$0xf]
      %v1402 = vld [vmem:[%s3 + $0x94] sm:$0xf]
      %v1403 = vld [vmem:[%s3 + $0x98] sm:$0xf]
      %v1404 = vld [vmem:[%s3 + $0x9c] sm:$0xf]
      %v1405 = vld [vmem:[%s3 + $0xa0] sm:$0xf]
      %v1406 = vld [vmem:[%s3 + $0xa4] sm:$0xf]
      %v1407 = vld [vmem:[%s3 + $0xa8] sm:$0xf]
      %v1408 = vld [vmem:[%s3 + $0xac] sm:$0xf]
      %v1409 = vld [vmem:[%s3 + $0xb0] sm:$0xf]
      %v1410 = vld [vmem:[%s3 + $0xb4] sm:$0xf]
      %v1411 = vld [vmem:[%s3 + $0xb8] sm:$0xf]
      %v1412 = vld [vmem:[%s3 + $0xbc] sm:$0xf]
      %v1413 = vld [vmem:[%s4] sm:$0x1]
      %v1415 = vlaneseq
      %v1416 = vshrl.u32 %v1415, 7
      %v1417 = vsub.s32 0, %v1416
      %v1418 = vrot.slane %v1413, %v1417
      %v1444 = vunpack.c.l.b16 %v1341
      %v1445 = vunpack.c.l.b16 %v1342
      %v1446 = vunpack.c.l.b16 %v1343
      %v1447 = vunpack.c.l.b16 %v1344
      %v1448 = vunpack.c.l.b16 %v1345
      %v1449 = vunpack.c.l.b16 %v1346
      %v1450 = vunpack.c.l.b16 %v1347
      %v1451 = vunpack.c.l.b16 %v1348
      %v1452 = vunpack.c.l.b16 %v1349
      %v1453 = vunpack.c.l.b16 %v1350
      %v1454 = vunpack.c.l.b16 %v1351
      %v1455 = vunpack.c.l.b16 %v1352
      %v1456 = vunpack.c.l.b16 %v1353
      %v1457 = vunpack.c.l.b16 %v1354
      %v1458 = vunpack.c.l.b16 %v1355
      %v1459 = vunpack.c.l.b16 %v1356
      %v1460 = vunpack.c.l.b16 %v1357
      %v1461 = vunpack.c.l.b16 %v1358
      %v1462 = vunpack.c.l.b16 %v1359
      %v1463 = vunpack.c.l.b16 %v1360
      %v1464 = vunpack.c.l.b16 %v1361
      %v1465 = vunpack.c.l.b16 %v1362
      %v1466 = vunpack.c.l.b16 %v1363
      %v1467 = vunpack.c.l.b16 %v1364
      %vm1468 = vcmask 1041409
      %v1469 = vsel %vm1468, %v1447, %v1444
      %vm1470 = vcmask 1042434
      %v1471 = vsel %vm1470, %v1450, %v1469
      %vm1472 = vcmask 1043459
      %v1473 = vsel %vm1472, %v1453, %v1471
      %vm1474 = vcmask 1044484
      %v1475 = vsel %vm1474, %v1456, %v1473
      %vm1476 = vcmask 1045509
      %v1477 = vsel %vm1476, %v1459, %v1475
      %vm1478 = vcmask 1046534
      %v1479 = vsel %vm1478, %v1462, %v1477
      %vm1480 = vcmask 1047559
      %v1481 = vsel %vm1480, %v1465, %v1479
      %v1482 = vsel %vm1468, %v1448, %v1445
      %v1483 = vsel %vm1470, %v1451, %v1482
      %v1484 = vsel %vm1472, %v1454, %v1483
      %v1485 = vsel %vm1474, %v1457, %v1484
      %v1486 = vsel %vm1476, %v1460, %v1485
      %v1487 = vsel %vm1478, %v1463, %v1486
      %v1488 = vsel %vm1480, %v1466, %v1487
      %v1489 = vsel %vm1468, %v1449, %v1446
      %v1490 = vsel %vm1470, %v1452, %v1489
      %v1491 = vsel %vm1472, %v1455, %v1490
      %v1492 = vsel %vm1474, %v1458, %v1491
      %v1493 = vsel %vm1476, %v1461, %v1492
      %v1494 = vsel %vm1478, %v1464, %v1493
      %v1495 = vsel %vm1480, %v1467, %v1494
      %v1496 = vpack.c.b16 %v1481, %v1481
      %v1497 = vpack.c.b16 %v1488, %v1488
      %v1498 = vpack.c.b16 %v1495, %v1495
      %v1550 = vunpack.c.l.b16 %v1365
      %v1551 = vunpack.c.l.b16 %v1366
      %v1552 = vunpack.c.l.b16 %v1367
      %v1553 = vunpack.c.l.b16 %v1368
      %v1554 = vunpack.c.l.b16 %v1369
      %v1555 = vunpack.c.l.b16 %v1370
      %v1556 = vunpack.c.l.b16 %v1371
      %v1557 = vunpack.c.l.b16 %v1372
      %v1558 = vunpack.c.l.b16 %v1373
      %v1559 = vunpack.c.l.b16 %v1374
      %v1560 = vunpack.c.l.b16 %v1375
      %v1561 = vunpack.c.l.b16 %v1376
      %v1562 = vunpack.c.l.b16 %v1377
      %v1563 = vunpack.c.l.b16 %v1378
      %v1564 = vunpack.c.l.b16 %v1379
      %v1565 = vunpack.c.l.b16 %v1380
      %v1566 = vunpack.c.l.b16 %v1381
      %v1567 = vunpack.c.l.b16 %v1382
      %v1568 = vunpack.c.l.b16 %v1383
      %v1569 = vunpack.c.l.b16 %v1384
      %v1570 = vunpack.c.l.b16 %v1385
      %v1571 = vunpack.c.l.b16 %v1386
      %v1572 = vunpack.c.l.b16 %v1387
      %v1573 = vunpack.c.l.b16 %v1388
      %v1574 = vunpack.c.l.b16 %v1389
      %v1575 = vunpack.c.l.b16 %v1390
      %v1576 = vunpack.c.l.b16 %v1391
      %v1577 = vunpack.c.l.b16 %v1392
      %v1578 = vunpack.c.l.b16 %v1393
      %v1579 = vunpack.c.l.b16 %v1394
      %v1580 = vunpack.c.l.b16 %v1395
      %v1581 = vunpack.c.l.b16 %v1396
      %v1582 = vunpack.c.l.b16 %v1397
      %v1583 = vunpack.c.l.b16 %v1398
      %v1584 = vunpack.c.l.b16 %v1399
      %v1585 = vunpack.c.l.b16 %v1400
      %v1586 = vunpack.c.l.b16 %v1401
      %v1587 = vunpack.c.l.b16 %v1402
      %v1588 = vunpack.c.l.b16 %v1403
      %v1589 = vunpack.c.l.b16 %v1404
      %v1590 = vunpack.c.l.b16 %v1405
      %v1591 = vunpack.c.l.b16 %v1406
      %v1592 = vunpack.c.l.b16 %v1407
      %v1593 = vunpack.c.l.b16 %v1408
      %v1594 = vunpack.c.l.b16 %v1409
      %v1595 = vunpack.c.l.b16 %v1410
      %v1596 = vunpack.c.l.b16 %v1411
      %v1597 = vunpack.c.l.b16 %v1412
      %v1598 = vpack.c.b16 %v1551, %v1550
      %v1599 = vpack.c.b16 %v1553, %v1552
      %v1600 = vpack.c.b16 %v1555, %v1554
      %v1601 = vpack.c.b16 %v1557, %v1556
      %v1602 = vpack.c.b16 %v1559, %v1558
      %v1603 = vpack.c.b16 %v1561, %v1560
      %v1604 = vpack.c.b16 %v1563, %v1562
      %v1605 = vpack.c.b16 %v1565, %v1564
      %v1606 = vpack.c.b16 %v1567, %v1566
      %v1607 = vpack.c.b16 %v1569, %v1568
      %v1608 = vpack.c.b16 %v1571, %v1570
      %v1609 = vpack.c.b16 %v1573, %v1572
      %v1610 = vpack.c.b16 %v1575, %v1574
      %v1611 = vpack.c.b16 %v1577, %v1576
      %v1612 = vpack.c.b16 %v1579, %v1578
      %v1613 = vpack.c.b16 %v1581, %v1580
      %v1614 = vpack.c.b16 %v1583, %v1582
      %v1615 = vpack.c.b16 %v1585, %v1584
      %v1616 = vpack.c.b16 %v1587, %v1586
      %v1617 = vpack.c.b16 %v1589, %v1588
      %v1618 = vpack.c.b16 %v1591, %v1590
      %v1619 = vpack.c.b16 %v1593, %v1592
      %v1620 = vpack.c.b16 %v1595, %v1594
      %v1621 = vpack.c.b16 %v1597, %v1596
      %1646 = vmatprep.subr.bf16.mxu0 0
      %1647 = vmatpush1.bf16.msra.mxu0 %v1598
      %1648 = vmatprep.subr.bf16.mxu0 0
      %1649 = vmatpush1.bf16.msra.mxu0 %v1599
      %1650 = vmatprep.subr.bf16.mxu0 0
      %1651 = vmatpush1.bf16.msra.mxu0 %v1600
      %1652 = vmatprep.subr.bf16.mxu0 0
      %1653 = vmatpush1.bf16.msra.mxu0 %v1601
      %1654 = vmatprep.subr.bf16.mxu0 0
      %1655 = vmatpush1.bf16.msra.mxu0 %v1602
      %1656 = vmatprep.subr.bf16.mxu0 0
      %1657 = vmatpush1.bf16.msra.mxu0 %v1603
      %1658 = vmatprep.subr.bf16.mxu0 0
      %1659 = vmatpush1.bf16.msra.mxu0 %v1604
      %1660 = vmatprep.subr.bf16.mxu0 0
      %1661 = vmatpush1.bf16.msra.mxu0 %v1605
      %1662 = vmatprep.subr.bf16.mxu0 0
      %1663 = vmatpush1.bf16.msra.mxu0 %v1606
      %1664 = vmatprep.subr.bf16.mxu0 0
      %1665 = vmatpush1.bf16.msra.mxu0 %v1607
      %1666 = vmatprep.subr.bf16.mxu0 0
      %1667 = vmatpush1.bf16.msra.mxu0 %v1608
      %1668 = vmatprep.subr.bf16.mxu0 0
      %1669 = vmatpush1.bf16.msra.mxu0 %v1609
      %1670 = vmatprep.subr.bf16.mxu0 0
      %1671 = vmatpush1.bf16.msra.mxu0 %v1610
      %1672 = vmatprep.subr.bf16.mxu0 0
      %1673 = vmatpush1.bf16.msra.mxu0 %v1611
      %1674 = vmatprep.subr.bf16.mxu0 0
      %1675 = vmatpush1.bf16.msra.mxu0 %v1612
      %1676 = vmatprep.subr.bf16.mxu0 0
      %1677 = vmatpush1.bf16.msra.mxu0 %v1613
      %1678 = vmatprep.mubr.bf16.mxu0 %v1497
      %1679 = vmatmul.mubr.bf16.gmra.mrb[0].mxu0 %v1496
      %v1680 = vpop.f32.mrb[0].mxu0
      %v1681 = vadd.f32 %v1418, %v1680
      %v1682 = vpop.f32.mrb[0].mxu0
      %v1683 = vpop.f32.mrb[0].mxu0
      %v1684 = vpop.f32.mrb[0].mxu0
      %1685 = vdwg.mxu0
      %1686 = vmatprep.subr.bf16.mxu0 0
      %1687 = vmatpush1.bf16.msra.mxu0 %v1614
      %1688 = vmatprep.subr.bf16.mxu0 0
      %1689 = vmatpush1.bf16.msra.mxu0 %v1615
      %1690 = vmatprep.subr.bf16.mxu0 0
      %1691 = vmatpush1.bf16.msra.mxu0 %v1616
      %1692 = vmatprep.subr.bf16.mxu0 0
      %1693 = vmatpush1.bf16.msra.mxu0 %v1617
      %1694 = vmatprep.subr.bf16.mxu0 0
      %1695 = vmatpush1.bf16.msra.mxu0 %v1618
      %1696 = vmatprep.subr.bf16.mxu0 0
      %1697 = vmatpush1.bf16.msra.mxu0 %v1619
      %1698 = vmatprep.subr.bf16.mxu0 0
      %1699 = vmatpush1.bf16.msra.mxu0 %v1620
      %1700 = vmatprep.subr.bf16.mxu0 0
      %1701 = vmatpush1.bf16.msra.mxu0 %v1621
      %1702 = vmatprep.subr.bf16.mxu0 0
      %1703 = vmatpush1.bf16.msra.mxu0 0
      %1704 = vmatprep.subr.bf16.mxu0 0
      %1705 = vmatpush1.bf16.msra.mxu0 0
      %1706 = vmatprep.subr.bf16.mxu0 0
      %1707 = vmatpush1.bf16.msra.mxu0 0
      %1708 = vmatprep.subr.bf16.mxu0 0
      %1709 = vmatpush1.bf16.msra.mxu0 0
      %1710 = vmatprep.subr.bf16.mxu0 0
      %1711 = vmatpush1.bf16.msra.mxu0 0
      %1712 = vmatprep.subr.bf16.mxu0 0
      %1713 = vmatpush1.bf16.msra.mxu0 0
      %1714 = vmatprep.subr.bf16.mxu0 0
      %1715 = vmatpush1.bf16.msra.mxu0 0
      %1716 = vmatprep.subr.bf16.mxu0 0
      %1717 = vmatpush1.bf16.msra.mxu0 0
      %1718 = vmatprep.mubr.bf16.mxu0 0
      %1719 = vmatmul.mubr.bf16.gmra.mrb[0].mxu0 %v1498
      %v1720 = vpop.f32.mrb[0].mxu0
      %v1721 = vadd.f32 %v1681, %v1720
      %v1722 = vpop.f32.mrb[0].mxu0
      %v1723 = vpop.f32.mrb[0].mxu0
      %v1724 = vpop.f32.mrb[0].mxu0
      %1725 = vdwg.mxu0
      %1726 = vst [vmem:[%s227] sm:$0xff] %v1721
      %p1727 = scmp.lt.s32.totalorder %s16, 1
      %s1728 = scalar_select %p1727, %s16, 1
      %s1729 = smul.addr %s1728, 8
      %s1730 = scalar_lea.vmem %s5, %s1729
      // Predicated region
      $region41: #{textcnn_head.1} parent=39 // pred_check
        %p1731 = pneg %p144
      $region42: #{textcnn_head.1} parent=39 // pred_check_branch
        %1733 = sbr.rel (%p1731) target = $region44
      $region43: #{textcnn_head.1} parent=39 // pred_region
        _
      $region44: #{textcnn_head.1} parent=39 // pred_fallthru
        _
    $region40: #{textcnn_head.1} parent=5 // pred_fallthru
      _
    %p1734 = scmp.le.s32.totalorder 2, %s11
    // Predicated region
    $region45: #{textcnn_head.1} parent=5 // pred_check
      %p1735 = pneg %p1734
    $region46: #{textcnn_head.1} parent=5 // pred_check_branch
      %1737 = sbr.rel (%p1735) target = $region48
    $region47: #{textcnn_head.1} parent=5 // pred_region
      %s1738 = ssub.s32 %s11, 2
      // Predicated region
      $region49: #{textcnn_head.1} parent=47 // pred_check
        %p1739 = pneg %p150
      $region50: #{textcnn_head.1} parent=47 // pred_check_branch
        %1741 = sbr.rel (%p1739) target = $region52
      $region51: #{textcnn_head.1} parent=47 // pred_region
        %p1742 = scmp.lt.s32.totalorder %s17, 1
        %s1743 = scalar_select %p1742, %s17, 1
        %s1744 = smul.addr %s1743, 8
        %s1745 = scalar_lea.vmem %s5, %s1744
      $region52: #{textcnn_head.1} parent=47 // pred_fallthru
        _
    $region48: #{textcnn_head.1} parent=5 // pred_fallthru
      _
  $region6: #{textcnn_head.1} parent=0 // loop_footer
    %s15 = sadd.s32 1, %s11
  $region7: #{textcnn_head.1} parent=0 // loop_footer_branch
    %10 = sbr.rel target = $region3
  $region8: #{textcnn_head.1} parent=0 // loop_exit
    _

</llo_original>
